<compile_context>
chip_gen: v7x
topology: tpu7x:2x2x1
jax: 0.10.0
libtpu: 0.0.40
codegen_flags: <defaults>
</compile_context>

<pallas_src>
import random

import jax
import jax.numpy as jnp
import numpy as np
from jax.experimental import pallas as pl
from jax.experimental.pallas import tpu as pltpu

HIGHEST = jax.lax.Precision.HIGHEST


def _sigmoid(x):
    # One EUP tanh push per call (instead of exp + reciprocal).
    return 0.5 * (jnp.tanh(0.5 * x) + 1.0)


# ----------------------------------------------------------------------------
# Kernel factory: teacher-forcing mask is static Python data, baked in.
# ----------------------------------------------------------------------------
def make_decoder_kernel(tf_mask, T, H, O):
    tf_mask = tuple(bool(m) for m in tf_mask)

    def kernel(
        c_ref,          # VMEM (B, H)        context
        tgt_proj_ref,   # VMEM (T, B, 4H)    target[:,t,:] @ wih_y, time-major
        wv_ref,         # VMEM (H, H)        V.weight^T
        bv_ref,         # VMEM (1, H)
        wih_c_ref,      # VMEM (H, 4H)       fused input weights, c part (reordered i,f,o,g)
        bg_ref,         # VMEM (1, 4H)       b_ih + b_hh
        wc_nf_ref,      # VMEM (H, 4H)       wih_c + wo_c @ wih_y  (non-TF fold, c part)
        bg_nf_ref,      # VMEM (1, 4H)       bg + bo @ wih_y       (non-TF fold, bias)
        whh_ref,        # VMEM (H, 4H)       fused hidden weights
        whh_fold_ref,   # VMEM (H, 8H)       [whh | wo_h @ wih_y]  (256 cols)
        wo_h_ref,       # VMEM (H, O)        h2o weight, h part
        wo_c_ref,       # VMEM (H, O)        h2o weight, c part
        bo_ref,         # VMEM (1, O)
        out_ref,        # VMEM (B, T*O)      outputs, lane-dense
    ):
        c = c_ref[...]

        # ---- loop-invariant context contributions (one-time prologue) ------
        gate_c = jnp.dot(c, wih_c_ref[...], preferred_element_type=jnp.float32) + bg_ref[...]
        gate_c_nf = jnp.dot(c, wc_nf_ref[...], preferred_element_type=jnp.float32) + bg_nf_ref[...]
        y_c = jnp.dot(c, wo_c_ref[...], preferred_element_type=jnp.float32) + bo_ref[...]

        # ---- h = cell = tanh(V(c))
        h = jnp.tanh(jnp.dot(c, wv_ref[...], preferred_element_type=jnp.float32) + bv_ref[...])
        cell = h

        whh = whh_ref[...]
        whh_fold = whh_fold_ref[...]
        wo_h = wo_h_ref[...]

        def lstm_update(gates, cell):
            # gate columns ordered [i, f, o | g]: one sigmoid over (B, 3H), one tanh over (B, H)
            ifo = _sigmoid(gates[:, : 3 * H])
            g_g = jnp.tanh(gates[:, 3 * H:])
            i_g = ifo[:, :H]
            f_g = ifo[:, H: 2 * H]
            o_g = ifo[:, 2 * H:]
            cell = f_g * cell + i_g * g_g
            h = o_g * jnp.tanh(cell)
            return h, cell

        # Static unroll: T is small and compile-time; states stay in vregs.
        for t in range(T):
            if t == 0:
                # y_0 = 0 -> feedback projection vanishes.
                gates = jnp.dot(h, whh, preferred_element_type=jnp.float32) + gate_c
            elif tf_mask[t - 1]:
                # Teacher-forced feedback: precomputed target projection (off-chain constant).
                gates = (
                    jnp.dot(h, whh, preferred_element_type=jnp.float32)
                    + tgt_proj_ref[t - 1]
                    + gate_c
                )
            else:
                # Autoregressive feedback folded into ONE wide matmul:
                #   h @ [whh | wo_h @ wih_y]   -> gates = cols[:4H] + cols[4H:] + const
                z = jnp.dot(h, whh_fold, preferred_element_type=jnp.float32)
                gates = z[:, : 4 * H] + z[:, 4 * H:] + gate_c_nf

            h, cell = lstm_update(gates, cell)

            # Readout is off the serial chain; store directly (masked vst, store slot has slack).
            y_out = jnp.dot(h, wo_h, preferred_element_type=jnp.float32) + y_c
            out_ref[:, t * O: (t + 1) * O] = y_out

    return kernel


# ----------------------------------------------------------------------------
# Parameter init (deterministic, PyTorch-like uniform(-1/sqrt(fan_in), +)).
# ----------------------------------------------------------------------------
def init_params(key, n_input, n_hidden, n_output):
    def u(k, shape, fan_in):
        b = 1.0 / np.sqrt(fan_in)
        return jax.random.uniform(k, shape, jnp.float32, -b, b)

    ks = jax.random.split(key, 8)
    H, F, O = n_hidden, n_input, n_output
    return dict(
        V_w=u(ks[0], (H, H), H),
        V_b=u(ks[1], (H,), H),
        W_ih=u(ks[2], (4 * H, F + H), H),
        W_hh=u(ks[3], (4 * H, H), H),
        b_ih=u(ks[4], (4 * H,), H),
        b_hh=u(ks[5], (4 * H,), H),
        W_h2o=u(ks[6], (O, 2 * H), 2 * H),
        b_h2o=u(ks[7], (O,), 2 * H),
    )


def _kernel_operands(p, c, target, n_input, n_hidden, n_output):
    """One-time weight fusion / folding (tiny, full-precision, outside the hot loop)."""
    H, F, O = n_hidden, n_input, n_output

    def reorder(w):  # gate blocks [i, f, g, o] -> [i, f, o, g] along the last dim
        return jnp.concatenate(
            [w[..., : 2 * H], w[..., 3 * H:], w[..., 2 * H: 3 * H]], axis=-1
        )

    wih_t = reorder(p["W_ih"].T)                       # (F+H, 4H)
    wih_y = wih_t[:F]                                  # (F, 4H)
    wih_c = wih_t[F:]                                  # (H, 4H)
    whh = reorder(p["W_hh"].T)                         # (H, 4H)
    bg = reorder((p["b_ih"] + p["b_hh"])[None, :])     # (1, 4H)

    wo_t = p["W_h2o"].T                                # (2H, O)
    wo_h, wo_c = wo_t[:H], wo_t[H:]
    bo = p["b_h2o"][None, :]                           # (1, O)

    # Readout -> feedback fold (removes the dependent MXU round-trip per step).
    w_fold = jnp.dot(wo_h, wih_y, precision=HIGHEST)            # (H, 4H)
    whh_fold = jnp.concatenate([whh, w_fold], axis=1)           # (H, 8H) = 256 cols
    wc_nf = wih_c + jnp.dot(wo_c, wih_y, precision=HIGHEST)     # (H, 4H)
    bg_nf = bg + jnp.dot(bo, wih_y, precision=HIGHEST)          # (1, 4H)

    # Teacher-forcing feedback, pre-projected and time-major: (T, B, 4H).
    tgt_proj = jnp.einsum("btf,fg->tbg", target, wih_y, precision=HIGHEST)

    return (
        c,
        tgt_proj,
        p["V_w"].T, p["V_b"][None, :],
        wih_c, bg,
        wc_nf, bg_nf,
        whh, whh_fold,
        wo_h, wo_c, bo,
    )


# ----------------------------------------------------------------------------
# Wrapper
# ----------------------------------------------------------------------------
def decoder_forward(params, c, target, temperature, seed=0):
    B, T, F = target.shape
    H = c.shape[1]
    O = params["W_h2o"].shape[0]
    assert F == O, "Decoder requires n_input == n_output (autoregressive feedback)"

    # Host-side teacher-forcing decisions (mirrors `random.random() < temperature`);
    # baked into the kernel as static constants.
    rng = random.Random(seed)
    tf_mask = [1 if rng.random() < temperature else 0 for _ in range(T)]

    operands = _kernel_operands(
        params, c.astype(jnp.float32), target.astype(jnp.float32), F, H, O
    )

    kernel = make_decoder_kernel(tf_mask, T, H, O)

    out_flat = pl.pallas_call(
        kernel,
        out_shape=jax.ShapeDtypeStruct((B, T * O), jnp.float32),
        in_specs=[pl.BlockSpec(memory_space=pltpu.MemorySpace.VMEM)] * len(operands),
        out_specs=pl.BlockSpec(memory_space=pltpu.MemorySpace.VMEM),
    )(*operands)

    # Pure reshape (no transpose) back to the PyTorch (B, T, O) convention.
    return out_flat.reshape(B, T, O), np.asarray(tf_mask, dtype=np.int32)


# ----------------------------------------------------------------------------
# Pure-JAX reference (mirrors the PyTorch forward, same teacher-force mask).
# ----------------------------------------------------------------------------
def decoder_reference(p, c, target, tf_mask):
    B, T, F = target.shape
    h = jnp.tanh(c @ p["V_w"].T + p["V_b"])
    cell = h
    y = jnp.zeros((B, F), jnp.float32)
    H = h.shape[1]
    outs = []
    for t in range(T):
        x = jnp.concatenate([y, c], axis=1)
        gates = x @ p["W_ih"].T + p["b_ih"] + h @ p["W_hh"].T + p["b_hh"]
        i_g = jax.nn.sigmoid(gates[:, 0:H])
        f_g = jax.nn.sigmoid(gates[:, H:2 * H])
        g_g = jnp.tanh(gates[:, 2 * H:3 * H])
        o_g = jax.nn.sigmoid(gates[:, 3 * H:4 * H])
        cell = f_g * cell + i_g * g_g
        h = o_g * jnp.tanh(cell)
        y = jnp.concatenate([h, c], axis=1) @ p["W_h2o"].T + p["b_h2o"]
        outs.append(y)
        if int(tf_mask[t]) > 0:
            y = target[:, t, :]
    return jnp.stack(outs, axis=1)


if __name__ == "__main__":
    n_input = n_output = 16
    n_hidden = 32
    B, T = 4, 8      # TODO(synk): call sites with many sequences should stack them
    #                 into one batched call (B up to 128/256) to fill MXU rows.
    temperature = 0.5

    key = jax.random.PRNGKey(0)
    kp, kc, kt = jax.random.split(key, 3)

    params = init_params(kp, n_input, n_hidden, n_output)
    c = jax.random.normal(kc, (B, n_hidden), jnp.float32)
    target = jax.random.normal(kt, (B, T, n_output), jnp.float32)

    out, tf_mask = decoder_forward(params, c, target, temperature, seed=0)
    out = jax.block_until_ready(out)

    ref = decoder_reference(params, c, target, tf_mask)
    np.testing.assert_allclose(np.asarray(out), np.asarray(ref), rtol=1e-4, atol=1e-4)

    print("KERNEL_OK")
</pallas_src>

<mosaic_0001>
module attributes {stable_mosaic.version = 11 : i64} {
  func.func @kernel(%arg0: memref<4x32xf32, #tpu.memory_space<vmem>>, %arg1: memref<8x4x128xf32, #tpu.memory_space<vmem>>, %arg2: memref<32x32xf32, #tpu.memory_space<vmem>>, %arg3: memref<1x32xf32, #tpu.memory_space<vmem>>, %arg4: memref<32x128xf32, #tpu.memory_space<vmem>>, %arg5: memref<1x128xf32, #tpu.memory_space<vmem>>, %arg6: memref<32x128xf32, #tpu.memory_space<vmem>>, %arg7: memref<1x128xf32, #tpu.memory_space<vmem>>, %arg8: memref<32x128xf32, #tpu.memory_space<vmem>>, %arg9: memref<32x256xf32, #tpu.memory_space<vmem>>, %arg10: memref<32x16xf32, #tpu.memory_space<vmem>>, %arg11: memref<32x16xf32, #tpu.memory_space<vmem>>, %arg12: memref<1x16xf32, #tpu.memory_space<vmem>>, %arg13: memref<4x128xf32, #tpu.memory_space<vmem>>) attributes {dimension_semantics = [], scalar_prefetch = 0 : i64, scratch_operands = 0 : i64, tpu.core_type = #tpu.core_type<tc>} {
    %c0 = arith.constant 0 : index
    %c0_0 = arith.constant 0 : index
    %0 = vector.load %arg0[%c0, %c0_0] : memref<4x32xf32, #tpu.memory_space<vmem>>, vector<4x32xf32>
    %c0_1 = arith.constant 0 : index
    %c0_2 = arith.constant 0 : index
    %1 = vector.load %arg4[%c0_1, %c0_2] : memref<32x128xf32, #tpu.memory_space<vmem>>, vector<32x128xf32>
    %cst = arith.constant dense<0.000000e+00> : vector<4x128xf32>
    %2 = tpu.matmul %0, %1, %cst {dimension_numbers = #tpu.dot_dimension_numbers<[1], [0], [0], [1], [0, 0, 1, 1], [], []>} : vector<4x32xf32>, vector<32x128xf32>, vector<4x128xf32> -> vector<4x128xf32>
    %c0_3 = arith.constant 0 : index
    %c0_4 = arith.constant 0 : index
    %3 = vector.load %arg5[%c0_3, %c0_4] : memref<1x128xf32, #tpu.memory_space<vmem>>, vector<1x128xf32>
    %4 = vector.broadcast %3 : vector<1x128xf32> to vector<4x128xf32>
    %5 = arith.addf %2, %4 : vector<4x128xf32>
    %c0_5 = arith.constant 0 : index
    %c0_6 = arith.constant 0 : index
    %6 = vector.load %arg6[%c0_5, %c0_6] : memref<32x128xf32, #tpu.memory_space<vmem>>, vector<32x128xf32>
    %cst_7 = arith.constant dense<0.000000e+00> : vector<4x128xf32>
    %7 = tpu.matmul %0, %6, %cst_7 {dimension_numbers = #tpu.dot_dimension_numbers<[1], [0], [0], [1], [0, 0, 1, 1], [], []>} : vector<4x32xf32>, vector<32x128xf32>, vector<4x128xf32> -> vector<4x128xf32>
    %c0_8 = arith.constant 0 : index
    %c0_9 = arith.constant 0 : index
    %8 = vector.load %arg7[%c0_8, %c0_9] : memref<1x128xf32, #tpu.memory_space<vmem>>, vector<1x128xf32>
    %9 = vector.broadcast %8 : vector<1x128xf32> to vector<4x128xf32>
    %10 = arith.addf %7, %9 : vector<4x128xf32>
    %c0_10 = arith.constant 0 : index
    %c0_11 = arith.constant 0 : index
    %11 = vector.load %arg11[%c0_10, %c0_11] : memref<32x16xf32, #tpu.memory_space<vmem>>, vector<32x16xf32>
    %cst_12 = arith.constant dense<0.000000e+00> : vector<4x16xf32>
    %12 = tpu.matmul %0, %11, %cst_12 {dimension_numbers = #tpu.dot_dimension_numbers<[1], [0], [0], [1], [0, 0, 1, 1], [], []>} : vector<4x32xf32>, vector<32x16xf32>, vector<4x16xf32> -> vector<4x16xf32>
    %c0_13 = arith.constant 0 : index
    %c0_14 = arith.constant 0 : index
    %13 = vector.load %arg12[%c0_13, %c0_14] : memref<1x16xf32, #tpu.memory_space<vmem>>, vector<1x16xf32>
    %14 = vector.broadcast %13 : vector<1x16xf32> to vector<4x16xf32>
    %15 = arith.addf %12, %14 : vector<4x16xf32>
    %c0_15 = arith.constant 0 : index
    %c0_16 = arith.constant 0 : index
    %16 = vector.load %arg2[%c0_15, %c0_16] : memref<32x32xf32, #tpu.memory_space<vmem>>, vector<32x32xf32>
    %cst_17 = arith.constant dense<0.000000e+00> : vector<4x32xf32>
    %17 = tpu.matmul %0, %16, %cst_17 {dimension_numbers = #tpu.dot_dimension_numbers<[1], [0], [0], [1], [0, 0, 1, 1], [], []>} : vector<4x32xf32>, vector<32x32xf32>, vector<4x32xf32> -> vector<4x32xf32>
    %c0_18 = arith.constant 0 : index
    %c0_19 = arith.constant 0 : index
    %18 = vector.load %arg3[%c0_18, %c0_19] : memref<1x32xf32, #tpu.memory_space<vmem>>, vector<1x32xf32>
    %19 = vector.broadcast %18 : vector<1x32xf32> to vector<4x32xf32>
    %20 = arith.addf %17, %19 : vector<4x32xf32>
    %21 = math.tanh %20 : vector<4x32xf32>
    %c0_20 = arith.constant 0 : index
    %c0_21 = arith.constant 0 : index
    %22 = vector.load %arg8[%c0_20, %c0_21] : memref<32x128xf32, #tpu.memory_space<vmem>>, vector<32x128xf32>
    %c0_22 = arith.constant 0 : index
    %c0_23 = arith.constant 0 : index
    %23 = vector.load %arg9[%c0_22, %c0_23] : memref<32x256xf32, #tpu.memory_space<vmem>>, vector<32x256xf32>
    %c0_24 = arith.constant 0 : index
    %c0_25 = arith.constant 0 : index
    %24 = vector.load %arg10[%c0_24, %c0_25] : memref<32x16xf32, #tpu.memory_space<vmem>>, vector<32x16xf32>
    %cst_26 = arith.constant dense<0.000000e+00> : vector<4x128xf32>
    %25 = tpu.matmul %21, %22, %cst_26 {dimension_numbers = #tpu.dot_dimension_numbers<[1], [0], [0], [1], [0, 0, 1, 1], [], []>} : vector<4x32xf32>, vector<32x128xf32>, vector<4x128xf32> -> vector<4x128xf32>
    %26 = arith.addf %25, %5 : vector<4x128xf32>
    %27 = vector.extract_strided_slice %26 {offsets = [0, 0], sizes = [4, 96], strides = [1, 1]} : vector<4x128xf32> to vector<4x96xf32>
    %cst_27 = arith.constant 5.000000e-01 : f32
    %28 = vector.broadcast %cst_27 : f32 to vector<4x96xf32>
    %29 = arith.mulf %28, %27 : vector<4x96xf32>
    %30 = math.tanh %29 : vector<4x96xf32>
    %cst_28 = arith.constant 1.000000e+00 : f32
    %31 = vector.broadcast %cst_28 : f32 to vector<4x96xf32>
    %32 = arith.addf %30, %31 : vector<4x96xf32>
    %cst_29 = arith.constant 5.000000e-01 : f32
    %33 = vector.broadcast %cst_29 : f32 to vector<4x96xf32>
    %34 = arith.mulf %33, %32 : vector<4x96xf32>
    %35 = vector.extract_strided_slice %26 {offsets = [0, 96], sizes = [4, 32], strides = [1, 1]} : vector<4x128xf32> to vector<4x32xf32>
    %36 = math.tanh %35 : vector<4x32xf32>
    %37 = vector.extract_strided_slice %34 {offsets = [0, 0], sizes = [4, 32], strides = [1, 1]} : vector<4x96xf32> to vector<4x32xf32>
    %38 = vector.extract_strided_slice %34 {offsets = [0, 32], sizes = [4, 32], strides = [1, 1]} : vector<4x96xf32> to vector<4x32xf32>
    %39 = vector.extract_strided_slice %34 {offsets = [0, 64], sizes = [4, 32], strides = [1, 1]} : vector<4x96xf32> to vector<4x32xf32>
    %40 = arith.mulf %38, %21 : vector<4x32xf32>
    %41 = arith.mulf %37, %36 : vector<4x32xf32>
    %42 = arith.addf %40, %41 : vector<4x32xf32>
    %43 = math.tanh %42 : vector<4x32xf32>
    %44 = arith.mulf %39, %43 : vector<4x32xf32>
    %cst_30 = arith.constant dense<0.000000e+00> : vector<4x16xf32>
    %45 = tpu.matmul %44, %24, %cst_30 {dimension_numbers = #tpu.dot_dimension_numbers<[1], [0], [0], [1], [0, 0, 1, 1], [], []>} : vector<4x32xf32>, vector<32x16xf32>, vector<4x16xf32> -> vector<4x16xf32>
    %46 = arith.addf %45, %15 : vector<4x16xf32>
    %c0_31 = arith.constant 0 : index
    %c0_32 = arith.constant 0 : index
    %47 = vector.load %arg13[%c0_31, %c0_32] : memref<4x128xf32, #tpu.memory_space<vmem>>, vector<4x16xf32>
    tpu.vector_store %arg13[%c0_31, %c0_32], %46 {strides = array<i32>} : memref<4x128xf32, #tpu.memory_space<vmem>>, vector<4x16xf32>,
    %cst_33 = arith.constant dense<0.000000e+00> : vector<4x256xf32>
    %48 = tpu.matmul %44, %23, %cst_33 {dimension_numbers = #tpu.dot_dimension_numbers<[1], [0], [0], [1], [0, 0, 1, 1], [], []>} : vector<4x32xf32>, vector<32x256xf32>, vector<4x256xf32> -> vector<4x256xf32>
    %49 = vector.extract_strided_slice %48 {offsets = [0, 0], sizes = [4, 128], strides = [1, 1]} : vector<4x256xf32> to vector<4x128xf32>
    %50 = vector.extract_strided_slice %48 {offsets = [0, 128], sizes = [4, 128], strides = [1, 1]} : vector<4x256xf32> to vector<4x128xf32>
    %51 = arith.addf %49, %50 : vector<4x128xf32>
    %52 = arith.addf %51, %10 : vector<4x128xf32>
    %53 = vector.extract_strided_slice %52 {offsets = [0, 0], sizes = [4, 96], strides = [1, 1]} : vector<4x128xf32> to vector<4x96xf32>
    %cst_34 = arith.constant 5.000000e-01 : f32
    %54 = vector.broadcast %cst_34 : f32 to vector<4x96xf32>
    %55 = arith.mulf %54, %53 : vector<4x96xf32>
    %56 = math.tanh %55 : vector<4x96xf32>
    %cst_35 = arith.constant 1.000000e+00 : f32
    %57 = vector.broadcast %cst_35 : f32 to vector<4x96xf32>
    %58 = arith.addf %56, %57 : vector<4x96xf32>
    %cst_36 = arith.constant 5.000000e-01 : f32
    %59 = vector.broadcast %cst_36 : f32 to vector<4x96xf32>
    %60 = arith.mulf %59, %58 : vector<4x96xf32>
    %61 = vector.extract_strided_slice %52 {offsets = [0, 96], sizes = [4, 32], strides = [1, 1]} : vector<4x128xf32> to vector<4x32xf32>
    %62 = math.tanh %61 : vector<4x32xf32>
    %63 = vector.extract_strided_slice %60 {offsets = [0, 0], sizes = [4, 32], strides = [1, 1]} : vector<4x96xf32> to vector<4x32xf32>
    %64 = vector.extract_strided_slice %60 {offsets = [0, 32], sizes = [4, 32], strides = [1, 1]} : vector<4x96xf32> to vector<4x32xf32>
    %65 = vector.extract_strided_slice %60 {offsets = [0, 64], sizes = [4, 32], strides = [1, 1]} : vector<4x96xf32> to vector<4x32xf32>
    %66 = arith.mulf %64, %42 : vector<4x32xf32>
    %67 = arith.mulf %63, %62 : vector<4x32xf32>
    %68 = arith.addf %66, %67 : vector<4x32xf32>
    %69 = math.tanh %68 : vector<4x32xf32>
    %70 = arith.mulf %65, %69 : vector<4x32xf32>
    %cst_37 = arith.constant dense<0.000000e+00> : vector<4x16xf32>
    %71 = tpu.matmul %70, %24, %cst_37 {dimension_numbers = #tpu.dot_dimension_numbers<[1], [0], [0], [1], [0, 0, 1, 1], [], []>} : vector<4x32xf32>, vector<32x16xf32>, vector<4x16xf32> -> vector<4x16xf32>
    %72 = arith.addf %71, %15 : vector<4x16xf32>
    %c0_38 = arith.constant 0 : index
    %c16 = arith.constant 16 : index
    %73 = vector.load %arg13[%c0_38, %c16] : memref<4x128xf32, #tpu.memory_space<vmem>>, vector<4x16xf32>
    tpu.vector_store %arg13[%c0_38, %c16], %72 {strides = array<i32>} : memref<4x128xf32, #tpu.memory_space<vmem>>, vector<4x16xf32>,
    %cst_39 = arith.constant dense<0.000000e+00> : vector<4x256xf32>
    %74 = tpu.matmul %70, %23, %cst_39 {dimension_numbers = #tpu.dot_dimension_numbers<[1], [0], [0], [1], [0, 0, 1, 1], [], []>} : vector<4x32xf32>, vector<32x256xf32>, vector<4x256xf32> -> vector<4x256xf32>
    %75 = vector.extract_strided_slice %74 {offsets = [0, 0], sizes = [4, 128], strides = [1, 1]} : vector<4x256xf32> to vector<4x128xf32>
    %76 = vector.extract_strided_slice %74 {offsets = [0, 128], sizes = [4, 128], strides = [1, 1]} : vector<4x256xf32> to vector<4x128xf32>
    %77 = arith.addf %75, %76 : vector<4x128xf32>
    %78 = arith.addf %77, %10 : vector<4x128xf32>
    %79 = vector.extract_strided_slice %78 {offsets = [0, 0], sizes = [4, 96], strides = [1, 1]} : vector<4x128xf32> to vector<4x96xf32>
    %cst_40 = arith.constant 5.000000e-01 : f32
    %80 = vector.broadcast %cst_40 : f32 to vector<4x96xf32>
    %81 = arith.mulf %80, %79 : vector<4x96xf32>
    %82 = math.tanh %81 : vector<4x96xf32>
    %cst_41 = arith.constant 1.000000e+00 : f32
    %83 = vector.broadcast %cst_41 : f32 to vector<4x96xf32>
    %84 = arith.addf %82, %83 : vector<4x96xf32>
    %cst_42 = arith.constant 5.000000e-01 : f32
    %85 = vector.broadcast %cst_42 : f32 to vector<4x96xf32>
    %86 = arith.mulf %85, %84 : vector<4x96xf32>
    %87 = vector.extract_strided_slice %78 {offsets = [0, 96], sizes = [4, 32], strides = [1, 1]} : vector<4x128xf32> to vector<4x32xf32>
    %88 = math.tanh %87 : vector<4x32xf32>
    %89 = vector.extract_strided_slice %86 {offsets = [0, 0], sizes = [4, 32], strides = [1, 1]} : vector<4x96xf32> to vector<4x32xf32>
    %90 = vector.extract_strided_slice %86 {offsets = [0, 32], sizes = [4, 32], strides = [1, 1]} : vector<4x96xf32> to vector<4x32xf32>
    %91 = vector.extract_strided_slice %86 {offsets = [0, 64], sizes = [4, 32], strides = [1, 1]} : vector<4x96xf32> to vector<4x32xf32>
    %92 = arith.mulf %90, %68 : vector<4x32xf32>
    %93 = arith.mulf %89, %88 : vector<4x32xf32>
    %94 = arith.addf %92, %93 : vector<4x32xf32>
    %95 = math.tanh %94 : vector<4x32xf32>
    %96 = arith.mulf %91, %95 : vector<4x32xf32>
    %cst_43 = arith.constant dense<0.000000e+00> : vector<4x16xf32>
    %97 = tpu.matmul %96, %24, %cst_43 {dimension_numbers = #tpu.dot_dimension_numbers<[1], [0], [0], [1], [0, 0, 1, 1], [], []>} : vector<4x32xf32>, vector<32x16xf32>, vector<4x16xf32> -> vector<4x16xf32>
    %98 = arith.addf %97, %15 : vector<4x16xf32>
    %c0_44 = arith.constant 0 : index
    %c32 = arith.constant 32 : index
    %99 = vector.load %arg13[%c0_44, %c32] : memref<4x128xf32, #tpu.memory_space<vmem>>, vector<4x16xf32>
    tpu.vector_store %arg13[%c0_44, %c32], %98 {strides = array<i32>} : memref<4x128xf32, #tpu.memory_space<vmem>>, vector<4x16xf32>,
    %cst_45 = arith.constant dense<0.000000e+00> : vector<4x128xf32>
    %100 = tpu.matmul %96, %22, %cst_45 {dimension_numbers = #tpu.dot_dimension_numbers<[1], [0], [0], [1], [0, 0, 1, 1], [], []>} : vector<4x32xf32>, vector<32x128xf32>, vector<4x128xf32> -> vector<4x128xf32>
    %c2 = arith.constant 2 : index
    %c0_46 = arith.constant 0 : index
    %c0_47 = arith.constant 0 : index
    %101 = vector.load %arg1[%c2, %c0_46, %c0_47] : memref<8x4x128xf32, #tpu.memory_space<vmem>>, vector<1x4x128xf32>
    %102 = vector.shape_cast %101 : vector<1x4x128xf32> to vector<4x128xf32>
    %103 = arith.addf %100, %102 : vector<4x128xf32>
    %104 = arith.addf %103, %5 : vector<4x128xf32>
    %105 = vector.extract_strided_slice %104 {offsets = [0, 0], sizes = [4, 96], strides = [1, 1]} : vector<4x128xf32> to vector<4x96xf32>
    %cst_48 = arith.constant 5.000000e-01 : f32
    %106 = vector.broadcast %cst_48 : f32 to vector<4x96xf32>
    %107 = arith.mulf %106, %105 : vector<4x96xf32>
    %108 = math.tanh %107 : vector<4x96xf32>
    %cst_49 = arith.constant 1.000000e+00 : f32
    %109 = vector.broadcast %cst_49 : f32 to vector<4x96xf32>
    %110 = arith.addf %108, %109 : vector<4x96xf32>
    %cst_50 = arith.constant 5.000000e-01 : f32
    %111 = vector.broadcast %cst_50 : f32 to vector<4x96xf32>
    %112 = arith.mulf %111, %110 : vector<4x96xf32>
    %113 = vector.extract_strided_slice %104 {offsets = [0, 96], sizes = [4, 32], strides = [1, 1]} : vector<4x128xf32> to vector<4x32xf32>
    %114 = math.tanh %113 : vector<4x32xf32>
    %115 = vector.extract_strided_slice %112 {offsets = [0, 0], sizes = [4, 32], strides = [1, 1]} : vector<4x96xf32> to vector<4x32xf32>
    %116 = vector.extract_strided_slice %112 {offsets = [0, 32], sizes = [4, 32], strides = [1, 1]} : vector<4x96xf32> to vector<4x32xf32>
    %117 = vector.extract_strided_slice %112 {offsets = [0, 64], sizes = [4, 32], strides = [1, 1]} : vector<4x96xf32> to vector<4x32xf32>
    %118 = arith.mulf %116, %94 : vector<4x32xf32>
    %119 = arith.mulf %115, %114 : vector<4x32xf32>
    %120 = arith.addf %118, %119 : vector<4x32xf32>
    %121 = math.tanh %120 : vector<4x32xf32>
    %122 = arith.mulf %117, %121 : vector<4x32xf32>
    %cst_51 = arith.constant dense<0.000000e+00> : vector<4x16xf32>
    %123 = tpu.matmul %122, %24, %cst_51 {dimension_numbers = #tpu.dot_dimension_numbers<[1], [0], [0], [1], [0, 0, 1, 1], [], []>} : vector<4x32xf32>, vector<32x16xf32>, vector<4x16xf32> -> vector<4x16xf32>
    %124 = arith.addf %123, %15 : vector<4x16xf32>
    %c0_52 = arith.constant 0 : index
    %c48 = arith.constant 48 : index
    %125 = vector.load %arg13[%c0_52, %c48] : memref<4x128xf32, #tpu.memory_space<vmem>>, vector<4x16xf32>
    tpu.vector_store %arg13[%c0_52, %c48], %124 {strides = array<i32>} : memref<4x128xf32, #tpu.memory_space<vmem>>, vector<4x16xf32>,
    %cst_53 = arith.constant dense<0.000000e+00> : vector<4x128xf32>
    %126 = tpu.matmul %122, %22, %cst_53 {dimension_numbers = #tpu.dot_dimension_numbers<[1], [0], [0], [1], [0, 0, 1, 1], [], []>} : vector<4x32xf32>, vector<32x128xf32>, vector<4x128xf32> -> vector<4x128xf32>
    %c3 = arith.constant 3 : index
    %c0_54 = arith.constant 0 : index
    %c0_55 = arith.constant 0 : index
    %127 = vector.load %arg1[%c3, %c0_54, %c0_55] : memref<8x4x128xf32, #tpu.memory_space<vmem>>, vector<1x4x128xf32>
    %128 = vector.shape_cast %127 : vector<1x4x128xf32> to vector<4x128xf32>
    %129 = arith.addf %126, %128 : vector<4x128xf32>
    %130 = arith.addf %129, %5 : vector<4x128xf32>
    %131 = vector.extract_strided_slice %130 {offsets = [0, 0], sizes = [4, 96], strides = [1, 1]} : vector<4x128xf32> to vector<4x96xf32>
    %cst_56 = arith.constant 5.000000e-01 : f32
    %132 = vector.broadcast %cst_56 : f32 to vector<4x96xf32>
    %133 = arith.mulf %132, %131 : vector<4x96xf32>
    %134 = math.tanh %133 : vector<4x96xf32>
    %cst_57 = arith.constant 1.000000e+00 : f32
    %135 = vector.broadcast %cst_57 : f32 to vector<4x96xf32>
    %136 = arith.addf %134, %135 : vector<4x96xf32>
    %cst_58 = arith.constant 5.000000e-01 : f32
    %137 = vector.broadcast %cst_58 : f32 to vector<4x96xf32>
    %138 = arith.mulf %137, %136 : vector<4x96xf32>
    %139 = vector.extract_strided_slice %130 {offsets = [0, 96], sizes = [4, 32], strides = [1, 1]} : vector<4x128xf32> to vector<4x32xf32>
    %140 = math.tanh %139 : vector<4x32xf32>
    %141 = vector.extract_strided_slice %138 {offsets = [0, 0], sizes = [4, 32], strides = [1, 1]} : vector<4x96xf32> to vector<4x32xf32>
    %142 = vector.extract_strided_slice %138 {offsets = [0, 32], sizes = [4, 32], strides = [1, 1]} : vector<4x96xf32> to vector<4x32xf32>
    %143 = vector.extract_strided_slice %138 {offsets = [0, 64], sizes = [4, 32], strides = [1, 1]} : vector<4x96xf32> to vector<4x32xf32>
    %144 = arith.mulf %142, %120 : vector<4x32xf32>
    %145 = arith.mulf %141, %140 : vector<4x32xf32>
    %146 = arith.addf %144, %145 : vector<4x32xf32>
    %147 = math.tanh %146 : vector<4x32xf32>
    %148 = arith.mulf %143, %147 : vector<4x32xf32>
    %cst_59 = arith.constant dense<0.000000e+00> : vector<4x16xf32>
    %149 = tpu.matmul %148, %24, %cst_59 {dimension_numbers = #tpu.dot_dimension_numbers<[1], [0], [0], [1], [0, 0, 1, 1], [], []>} : vector<4x32xf32>, vector<32x16xf32>, vector<4x16xf32> -> vector<4x16xf32>
    %150 = arith.addf %149, %15 : vector<4x16xf32>
    %c0_60 = arith.constant 0 : index
    %c64 = arith.constant 64 : index
    %151 = vector.load %arg13[%c0_60, %c64] : memref<4x128xf32, #tpu.memory_space<vmem>>, vector<4x16xf32>
    tpu.vector_store %arg13[%c0_60, %c64], %150 {strides = array<i32>} : memref<4x128xf32, #tpu.memory_space<vmem>>, vector<4x16xf32>,
    %cst_61 = arith.constant dense<0.000000e+00> : vector<4x256xf32>
    %152 = tpu.matmul %148, %23, %cst_61 {dimension_numbers = #tpu.dot_dimension_numbers<[1], [0], [0], [1], [0, 0, 1, 1], [], []>} : vector<4x32xf32>, vector<32x256xf32>, vector<4x256xf32> -> vector<4x256xf32>
    %153 = vector.extract_strided_slice %152 {offsets = [0, 0], sizes = [4, 128], strides = [1, 1]} : vector<4x256xf32> to vector<4x128xf32>
    %154 = vector.extract_strided_slice %152 {offsets = [0, 128], sizes = [4, 128], strides = [1, 1]} : vector<4x256xf32> to vector<4x128xf32>
    %155 = arith.addf %153, %154 : vector<4x128xf32>
    %156 = arith.addf %155, %10 : vector<4x128xf32>
    %157 = vector.extract_strided_slice %156 {offsets = [0, 0], sizes = [4, 96], strides = [1, 1]} : vector<4x128xf32> to vector<4x96xf32>
    %cst_62 = arith.constant 5.000000e-01 : f32
    %158 = vector.broadcast %cst_62 : f32 to vector<4x96xf32>
    %159 = arith.mulf %158, %157 : vector<4x96xf32>
    %160 = math.tanh %159 : vector<4x96xf32>
    %cst_63 = arith.constant 1.000000e+00 : f32
    %161 = vector.broadcast %cst_63 : f32 to vector<4x96xf32>
    %162 = arith.addf %160, %161 : vector<4x96xf32>
    %cst_64 = arith.constant 5.000000e-01 : f32
    %163 = vector.broadcast %cst_64 : f32 to vector<4x96xf32>
    %164 = arith.mulf %163, %162 : vector<4x96xf32>
    %165 = vector.extract_strided_slice %156 {offsets = [0, 96], sizes = [4, 32], strides = [1, 1]} : vector<4x128xf32> to vector<4x32xf32>
    %166 = math.tanh %165 : vector<4x32xf32>
    %167 = vector.extract_strided_slice %164 {offsets = [0, 0], sizes = [4, 32], strides = [1, 1]} : vector<4x96xf32> to vector<4x32xf32>
    %168 = vector.extract_strided_slice %164 {offsets = [0, 32], sizes = [4, 32], strides = [1, 1]} : vector<4x96xf32> to vector<4x32xf32>
    %169 = vector.extract_strided_slice %164 {offsets = [0, 64], sizes = [4, 32], strides = [1, 1]} : vector<4x96xf32> to vector<4x32xf32>
    %170 = arith.mulf %168, %146 : vector<4x32xf32>
    %171 = arith.mulf %167, %166 : vector<4x32xf32>
    %172 = arith.addf %170, %171 : vector<4x32xf32>
    %173 = math.tanh %172 : vector<4x32xf32>
    %174 = arith.mulf %169, %173 : vector<4x32xf32>
    %cst_65 = arith.constant dense<0.000000e+00> : vector<4x16xf32>
    %175 = tpu.matmul %174, %24, %cst_65 {dimension_numbers = #tpu.dot_dimension_numbers<[1], [0], [0], [1], [0, 0, 1, 1], [], []>} : vector<4x32xf32>, vector<32x16xf32>, vector<4x16xf32> -> vector<4x16xf32>
    %176 = arith.addf %175, %15 : vector<4x16xf32>
    %c0_66 = arith.constant 0 : index
    %c80 = arith.constant 80 : index
    %177 = vector.load %arg13[%c0_66, %c80] : memref<4x128xf32, #tpu.memory_space<vmem>>, vector<4x16xf32>
    tpu.vector_store %arg13[%c0_66, %c80], %176 {strides = array<i32>} : memref<4x128xf32, #tpu.memory_space<vmem>>, vector<4x16xf32>,
    %cst_67 = arith.constant dense<0.000000e+00> : vector<4x128xf32>
    %178 = tpu.matmul %174, %22, %cst_67 {dimension_numbers = #tpu.dot_dimension_numbers<[1], [0], [0], [1], [0, 0, 1, 1], [], []>} : vector<4x32xf32>, vector<32x128xf32>, vector<4x128xf32> -> vector<4x128xf32>
    %c5 = arith.constant 5 : index
    %c0_68 = arith.constant 0 : index
    %c0_69 = arith.constant 0 : index
    %179 = vector.load %arg1[%c5, %c0_68, %c0_69] : memref<8x4x128xf32, #tpu.memory_space<vmem>>, vector<1x4x128xf32>
    %180 = vector.shape_cast %179 : vector<1x4x128xf32> to vector<4x128xf32>
    %181 = arith.addf %178, %180 : vector<4x128xf32>
    %182 = arith.addf %181, %5 : vector<4x128xf32>
    %183 = vector.extract_strided_slice %182 {offsets = [0, 0], sizes = [4, 96], strides = [1, 1]} : vector<4x128xf32> to vector<4x96xf32>
    %cst_70 = arith.constant 5.000000e-01 : f32
    %184 = vector.broadcast %cst_70 : f32 to vector<4x96xf32>
    %185 = arith.mulf %184, %183 : vector<4x96xf32>
    %186 = math.tanh %185 : vector<4x96xf32>
    %cst_71 = arith.constant 1.000000e+00 : f32
    %187 = vector.broadcast %cst_71 : f32 to vector<4x96xf32>
    %188 = arith.addf %186, %187 : vector<4x96xf32>
    %cst_72 = arith.constant 5.000000e-01 : f32
    %189 = vector.broadcast %cst_72 : f32 to vector<4x96xf32>
    %190 = arith.mulf %189, %188 : vector<4x96xf32>
    %191 = vector.extract_strided_slice %182 {offsets = [0, 96], sizes = [4, 32], strides = [1, 1]} : vector<4x128xf32> to vector<4x32xf32>
    %192 = math.tanh %191 : vector<4x32xf32>
    %193 = vector.extract_strided_slice %190 {offsets = [0, 0], sizes = [4, 32], strides = [1, 1]} : vector<4x96xf32> to vector<4x32xf32>
    %194 = vector.extract_strided_slice %190 {offsets = [0, 32], sizes = [4, 32], strides = [1, 1]} : vector<4x96xf32> to vector<4x32xf32>
    %195 = vector.extract_strided_slice %190 {offsets = [0, 64], sizes = [4, 32], strides = [1, 1]} : vector<4x96xf32> to vector<4x32xf32>
    %196 = arith.mulf %194, %172 : vector<4x32xf32>
    %197 = arith.mulf %193, %192 : vector<4x32xf32>
    %198 = arith.addf %196, %197 : vector<4x32xf32>
    %199 = math.tanh %198 : vector<4x32xf32>
    %200 = arith.mulf %195, %199 : vector<4x32xf32>
    %cst_73 = arith.constant dense<0.000000e+00> : vector<4x16xf32>
    %201 = tpu.matmul %200, %24, %cst_73 {dimension_numbers = #tpu.dot_dimension_numbers<[1], [0], [0], [1], [0, 0, 1, 1], [], []>} : vector<4x32xf32>, vector<32x16xf32>, vector<4x16xf32> -> vector<4x16xf32>
    %202 = arith.addf %201, %15 : vector<4x16xf32>
    %c0_74 = arith.constant 0 : index
    %c96 = arith.constant 96 : index
    %203 = vector.load %arg13[%c0_74, %c96] : memref<4x128xf32, #tpu.memory_space<vmem>>, vector<4x16xf32>
    tpu.vector_store %arg13[%c0_74, %c96], %202 {strides = array<i32>} : memref<4x128xf32, #tpu.memory_space<vmem>>, vector<4x16xf32>,
    %cst_75 = arith.constant dense<0.000000e+00> : vector<4x256xf32>
    %204 = tpu.matmul %200, %23, %cst_75 {dimension_numbers = #tpu.dot_dimension_numbers<[1], [0], [0], [1], [0, 0, 1, 1], [], []>} : vector<4x32xf32>, vector<32x256xf32>, vector<4x256xf32> -> vector<4x256xf32>
    %205 = vector.extract_strided_slice %204 {offsets = [0, 0], sizes = [4, 128], strides = [1, 1]} : vector<4x256xf32> to vector<4x128xf32>
    %206 = vector.extract_strided_slice %204 {offsets = [0, 128], sizes = [4, 128], strides = [1, 1]} : vector<4x256xf32> to vector<4x128xf32>
    %207 = arith.addf %205, %206 : vector<4x128xf32>
    %208 = arith.addf %207, %10 : vector<4x128xf32>
    %209 = vector.extract_strided_slice %208 {offsets = [0, 0], sizes = [4, 96], strides = [1, 1]} : vector<4x128xf32> to vector<4x96xf32>
    %cst_76 = arith.constant 5.000000e-01 : f32
    %210 = vector.broadcast %cst_76 : f32 to vector<4x96xf32>
    %211 = arith.mulf %210, %209 : vector<4x96xf32>
    %212 = math.tanh %211 : vector<4x96xf32>
    %cst_77 = arith.constant 1.000000e+00 : f32
    %213 = vector.broadcast %cst_77 : f32 to vector<4x96xf32>
    %214 = arith.addf %212, %213 : vector<4x96xf32>
    %cst_78 = arith.constant 5.000000e-01 : f32
    %215 = vector.broadcast %cst_78 : f32 to vector<4x96xf32>
    %216 = arith.mulf %215, %214 : vector<4x96xf32>
    %217 = vector.extract_strided_slice %208 {offsets = [0, 96], sizes = [4, 32], strides = [1, 1]} : vector<4x128xf32> to vector<4x32xf32>
    %218 = math.tanh %217 : vector<4x32xf32>
    %219 = vector.extract_strided_slice %216 {offsets = [0, 0], sizes = [4, 32], strides = [1, 1]} : vector<4x96xf32> to vector<4x32xf32>
    %220 = vector.extract_strided_slice %216 {offsets = [0, 32], sizes = [4, 32], strides = [1, 1]} : vector<4x96xf32> to vector<4x32xf32>
    %221 = vector.extract_strided_slice %216 {offsets = [0, 64], sizes = [4, 32], strides = [1, 1]} : vector<4x96xf32> to vector<4x32xf32>
    %222 = arith.mulf %220, %198 : vector<4x32xf32>
    %223 = arith.mulf %219, %218 : vector<4x32xf32>
    %224 = arith.addf %222, %223 : vector<4x32xf32>
    %225 = math.tanh %224 : vector<4x32xf32>
    %226 = arith.mulf %221, %225 : vector<4x32xf32>
    %cst_79 = arith.constant dense<0.000000e+00> : vector<4x16xf32>
    %227 = tpu.matmul %226, %24, %cst_79 {dimension_numbers = #tpu.dot_dimension_numbers<[1], [0], [0], [1], [0, 0, 1, 1], [], []>} : vector<4x32xf32>, vector<32x16xf32>, vector<4x16xf32> -> vector<4x16xf32>
    %228 = arith.addf %227, %15 : vector<4x16xf32>
    %c0_80 = arith.constant 0 : index
    %c112 = arith.constant 112 : index
    %229 = vector.load %arg13[%c0_80, %c112] : memref<4x128xf32, #tpu.memory_space<vmem>>, vector<4x16xf32>
    tpu.vector_store %arg13[%c0_80, %c112], %228 {strides = array<i32>} : memref<4x128xf32, #tpu.memory_space<vmem>>, vector<4x16xf32>,
    return
  }
}

</mosaic_0001>

<llo_original>
// kernel: tpu_custom_call.1
$region0: #{tpu_custom_call.1}
  #allocation0 [shape = 'u32[]', space=smem, size = 0x4, offset = 0x4, fixed_abs, tag = 'smem constant byte address 0x4 - core index']
  #allocation1 [shape = 'u32[144,128]{1,0:T(1,128)}', space=vmem, size = 0x12000, scoped, tag = 'internal scratch']
  %s0 = inlined_call_operand.hbm [shape: f32[4,32], index: 0, kind: input, shape index: {}]
  %s1 = inlined_call_operand.vmem [shape: f32[8,4,128], index: 1, kind: input, shape index: {}]
  %s2 = inlined_call_operand.hbm [shape: f32[32,32], index: 2, kind: input, shape index: {}]
  %s3 = inlined_call_operand.vmem [shape: f32[1,32], index: 3, kind: input, shape index: {}]
  %s4 = inlined_call_operand.hbm [shape: f32[32,128], index: 4, kind: input, shape index: {}]
  %s5 = inlined_call_operand.vmem [shape: f32[1,128], index: 5, kind: input, shape index: {}]
  %s6 = inlined_call_operand.hbm [shape: f32[32,128], index: 6, kind: input, shape index: {}]
  %s7 = inlined_call_operand.hbm [shape: f32[1,128], index: 7, kind: input, shape index: {}]
  %s8 = inlined_call_operand.hbm [shape: f32[32,128], index: 8, kind: input, shape index: {}]
  %s9 = inlined_call_operand.vmem [shape: f32[32,256], index: 9, kind: input, shape index: {}]
  %s10 = inlined_call_operand.vmem [shape: f32[32,16], index: 10, kind: input, shape index: {}]
  %s11 = inlined_call_operand.vmem [shape: f32[32,16], index: 11, kind: input, shape index: {}]
  %s12 = inlined_call_operand.vmem [shape: f32[1,16], index: 12, kind: input, shape index: {}]
  %s13 = inlined_call_operand.hbm [shape: f32[4,128], index: 13, kind: output, shape index: {}]
  %s14 = sld [smem:[#allocation0]]
  $region86: #{tpu_custom_call.1} parent=0
    _
  %s16 = ssub.s32 1, %s14
  %s17 = scalar_select 0, %s16, %s14
  $region1: #{tpu_custom_call.1} parent=0
    #allocation2 [shape = 'u8[2048]{0}', space=vmem, size = 0x800, scoped, tag = 'input window, operand 0, single buffered']
    #allocation3 [shape = 's32[1]{0}', space=sflag, size = 0x4, scoped, tag = 'scoped memory for tpu_custom_call.1']
    #allocation4 [shape = 's32[1]{0}', space=sflag, size = 0x4, scoped, tag = 'scoped memory for tpu_custom_call.1']
    #allocation5 [shape = 'u8[16384]{0}', space=vmem, size = 0x4000, scoped, tag = 'input window, operand 2, single buffered']
    #allocation6 [shape = 's32[1]{0}', space=sflag, size = 0x4, scoped, tag = 'scoped memory for tpu_custom_call.1']
    #allocation7 [shape = 'u8[16384]{0}', space=vmem, size = 0x4000, scoped, tag = 'input window, operand 4, single buffered']
    #allocation8 [shape = 'u8[16384]{0}', space=vmem, size = 0x4000, scoped, tag = 'input window, operand 6, single buffered']
    #allocation9 [shape = 's32[1]{0}', space=sflag, size = 0x4, scoped, tag = 'scoped memory for tpu_custom_call.1']
    #allocation10 [shape = 'u8[512]{0}', space=vmem, size = 0x400, scoped, tag = 'input window, operand 7, single buffered']
    #allocation11 [shape = 'u8[16384]{0}', space=vmem, size = 0x4000, scoped, tag = 'input window, operand 8, single buffered']
    #allocation12 [shape = 's32[1]{0}', space=sflag, size = 0x4, scoped, tag = 'scoped memory for tpu_custom_call.1']
    #allocation13 [shape = 'u8[2048]{0}', space=vmem, size = 0x800, scoped, tag = 'output window, operand 0, single buffered']
    %18 = vsyncpa [#allocation3], 0
    %19 = vsyncpa [#allocation6], 0
    %20 = vsyncpa [#allocation9], 0
    %21 = vsyncpa [#allocation12], 0
    %22 = vsyncpa [#allocation4], 0
    // Predicated region
    $region2: #{tpu_custom_call.1} parent=1 // pred_check
      _
    $region3: #{tpu_custom_call.1} parent=1 // pred_check_branch
      %24 = sbr.rel (0) target = $region5
    $region4: #{tpu_custom_call.1} parent=1 // pred_region
      %s26 = ssub.s32 64, 64
      %27 = vsyncadd [#allocation3], %s26
      %s29 = sshll.u32 [#allocation2], 4
      %s30 = int_to_ptr.vmem [resolvable:$true] %s29
      %32 = dma.hbm_to_vmem [thread:$0]  %s0, 64, %s30, [#allocation3]
    $region5: #{tpu_custom_call.1} parent=1 // pred_fallthru
      _
    // Predicated region
    $region6: #{tpu_custom_call.1} parent=1 // pred_check
      _
    $region7: #{tpu_custom_call.1} parent=1 // pred_check_branch
      %34 = sbr.rel (0) target = $region9
    $region8: #{tpu_custom_call.1} parent=1 // pred_region
      _
    $region9: #{tpu_custom_call.1} parent=1 // pred_fallthru
      _
    // Predicated region
    $region10: #{tpu_custom_call.1} parent=1 // pred_check
      _
    $region11: #{tpu_custom_call.1} parent=1 // pred_check_branch
      %36 = sbr.rel (0) target = $region13
    $region12: #{tpu_custom_call.1} parent=1 // pred_region
      %s38 = ssub.s32 512, 512
      %39 = vsyncadd [#allocation6], %s38
      %s40 = sshll.u32 [#allocation5], 4
      %s41 = int_to_ptr.vmem [resolvable:$true] %s40
      %46 = dma.hbm_to_vmem [thread:$0]  %s2, 512, %s41, [#allocation6], 128, 128, 8
    $region13: #{tpu_custom_call.1} parent=1 // pred_fallthru
      _
    // Predicated region
    $region14: #{tpu_custom_call.1} parent=1 // pred_check
      _
    $region15: #{tpu_custom_call.1} parent=1 // pred_check_branch
      %48 = sbr.rel (0) target = $region17
    $region16: #{tpu_custom_call.1} parent=1 // pred_region
      _
    $region17: #{tpu_custom_call.1} parent=1 // pred_fallthru
      _
    // Predicated region
    $region18: #{tpu_custom_call.1} parent=1 // pred_check
      _
    $region19: #{tpu_custom_call.1} parent=1 // pred_check_branch
      %50 = sbr.rel (0) target = $region21
    $region20: #{tpu_custom_call.1} parent=1 // pred_region
      %s52 = ssub.s32 512, 512
      %53 = vsyncadd [#allocation6], %s52
      %s54 = sshll.u32 [#allocation7], 4
      %s55 = int_to_ptr.vmem [resolvable:$true] %s54
      %60 = dma.hbm_to_vmem [thread:$0]  %s4, 512, %s55, [#allocation6], 128, 128, 8
    $region21: #{tpu_custom_call.1} parent=1 // pred_fallthru
      _
    // Predicated region
    $region22: #{tpu_custom_call.1} parent=1 // pred_check
      _
    $region23: #{tpu_custom_call.1} parent=1 // pred_check_branch
      %62 = sbr.rel (0) target = $region25
    $region24: #{tpu_custom_call.1} parent=1 // pred_region
      _
    $region25: #{tpu_custom_call.1} parent=1 // pred_fallthru
      _
    // Predicated region
    $region26: #{tpu_custom_call.1} parent=1 // pred_check
      _
    $region27: #{tpu_custom_call.1} parent=1 // pred_check_branch
      %64 = sbr.rel (0) target = $region29
    $region28: #{tpu_custom_call.1} parent=1 // pred_region
      %s66 = ssub.s32 512, 512
      %67 = vsyncadd [#allocation9], %s66
      %s68 = sshll.u32 [#allocation8], 4
      %s69 = int_to_ptr.vmem [resolvable:$true] %s68
      %74 = dma.hbm_to_vmem [thread:$0]  %s6, 512, %s69, [#allocation9], 128, 128, 8
    $region29: #{tpu_custom_call.1} parent=1 // pred_fallthru
      _
    // Predicated region
    $region30: #{tpu_custom_call.1} parent=1 // pred_check
      _
    $region31: #{tpu_custom_call.1} parent=1 // pred_check_branch
      %76 = sbr.rel (0) target = $region33
    $region32: #{tpu_custom_call.1} parent=1 // pred_region
      %s78 = ssub.s32 16, 16
      %79 = vsyncadd [#allocation9], %s78
      %s81 = sshll.u32 [#allocation10], 4
      %s82 = int_to_ptr.vmem [resolvable:$true] %s81
      %84 = dma.hbm_to_vmem [thread:$0]  %s7, 16, %s82, [#allocation9]
    $region33: #{tpu_custom_call.1} parent=1 // pred_fallthru
      _
    // Predicated region
    $region34: #{tpu_custom_call.1} parent=1 // pred_check
      _
    $region35: #{tpu_custom_call.1} parent=1 // pred_check_branch
      %86 = sbr.rel (0) target = $region37
    $region36: #{tpu_custom_call.1} parent=1 // pred_region
      %s88 = ssub.s32 512, 512
      %89 = vsyncadd [#allocation12], %s88
      %s90 = sshll.u32 [#allocation11], 4
      %s91 = int_to_ptr.vmem [resolvable:$true] %s90
      %96 = dma.hbm_to_vmem [thread:$0]  %s8, 512, %s91, [#allocation12], 128, 128, 8
    $region37: #{tpu_custom_call.1} parent=1 // pred_fallthru
      _
    // Predicated region
    $region38: #{tpu_custom_call.1} parent=1 // pred_check
      _
    $region39: #{tpu_custom_call.1} parent=1 // pred_check_branch
      %98 = sbr.rel (0) target = $region41
    $region40: #{tpu_custom_call.1} parent=1 // pred_region
      _
    $region41: #{tpu_custom_call.1} parent=1 // pred_fallthru
      _
    // Predicated region
    $region42: #{tpu_custom_call.1} parent=1 // pred_check
      _
    $region43: #{tpu_custom_call.1} parent=1 // pred_check_branch
      %100 = sbr.rel (0) target = $region45
    $region44: #{tpu_custom_call.1} parent=1 // pred_region
      _
    $region45: #{tpu_custom_call.1} parent=1 // pred_fallthru
      _
    // Predicated region
    $region46: #{tpu_custom_call.1} parent=1 // pred_check
      _
    $region47: #{tpu_custom_call.1} parent=1 // pred_check_branch
      %102 = sbr.rel (0) target = $region49
    $region48: #{tpu_custom_call.1} parent=1 // pred_region
      _
    $region49: #{tpu_custom_call.1} parent=1 // pred_fallthru
      _
    // Predicated region
    $region50: #{tpu_custom_call.1} parent=1 // pred_check
      _
    $region51: #{tpu_custom_call.1} parent=1 // pred_check_branch
      %104 = sbr.rel (0) target = $region53
    $region52: #{tpu_custom_call.1} parent=1 // pred_region
      _
    $region53: #{tpu_custom_call.1} parent=1 // pred_fallthru
      _
    // Predicated region
    $region54: #{tpu_custom_call.1} parent=1 // pred_check
      _
    $region55: #{tpu_custom_call.1} parent=1 // pred_check_branch
      %106 = sbr.rel (0) target = $region57
    $region56: #{tpu_custom_call.1} parent=1 // pred_region
      %107 = dma.done [#allocation3], 64
    $region57: #{tpu_custom_call.1} parent=1 // pred_fallthru
      _
    // Predicated region
    $region58: #{tpu_custom_call.1} parent=1 // pred_check
      _
    $region59: #{tpu_custom_call.1} parent=1 // pred_check_branch
      %109 = sbr.rel (0) target = $region61
    $region60: #{tpu_custom_call.1} parent=1 // pred_region
      %110 = dma.done [#allocation6], 512
    $region61: #{tpu_custom_call.1} parent=1 // pred_fallthru
      _
    // Predicated region
    $region62: #{tpu_custom_call.1} parent=1 // pred_check
      _
    $region63: #{tpu_custom_call.1} parent=1 // pred_check_branch
      %112 = sbr.rel (0) target = $region65
    $region64: #{tpu_custom_call.1} parent=1 // pred_region
      %113 = dma.done [#allocation6], 512
    $region65: #{tpu_custom_call.1} parent=1 // pred_fallthru
      _
    // Predicated region
    $region66: #{tpu_custom_call.1} parent=1 // pred_check
      _
    $region67: #{tpu_custom_call.1} parent=1 // pred_check_branch
      %115 = sbr.rel (0) target = $region69
    $region68: #{tpu_custom_call.1} parent=1 // pred_region
      %116 = dma.done [#allocation9], 512
    $region69: #{tpu_custom_call.1} parent=1 // pred_fallthru
      _
    // Predicated region
    $region70: #{tpu_custom_call.1} parent=1 // pred_check
      _
    $region71: #{tpu_custom_call.1} parent=1 // pred_check_branch
      %118 = sbr.rel (0) target = $region73
    $region72: #{tpu_custom_call.1} parent=1 // pred_region
      %119 = dma.done [#allocation9], 16
    $region73: #{tpu_custom_call.1} parent=1 // pred_fallthru
      _
    // Predicated region
    $region74: #{tpu_custom_call.1} parent=1 // pred_check
      _
    $region75: #{tpu_custom_call.1} parent=1 // pred_check_branch
      %121 = sbr.rel (0) target = $region77
    $region76: #{tpu_custom_call.1} parent=1 // pred_region
      %122 = dma.done [#allocation12], 512
    $region77: #{tpu_custom_call.1} parent=1 // pred_fallthru
      _
    %v123 = vld [vmem:[#allocation2] sm:$0xf]
    %v124 = vld [vmem:[#allocation7] sm:$0xff]
    %v125 = vld [vmem:[#allocation7 + $0x8] sm:$0xff]
    %v126 = vld [vmem:[#allocation7 + $0x10] sm:$0xff]
    %v127 = vld [vmem:[#allocation7 + $0x18] sm:$0xff]
    %v128 = vld [vmem:[%s5] sm:$0x1]
    %v130 = vlaneseq
    %v131 = vshrl.u32 %v130, 7
    %v132 = vsub.s32 0, %v131
    %v133 = vrot.slane %v128, %v132
    %vm135 = vcmask 261120
    %v137 = vsel %vm135, %v123, 0
    %139 = vmatprep.subr.mxu0 0.0
    %140 = vmatpush1.msra.mxu0 %v124
    %141 = vmatprep.subr.mxu0 0.0
    %142 = vmatpush1.msra.mxu0 %v125
    %143 = vmatprep.subr.mxu0 0.0
    %144 = vmatpush1.msra.mxu0 %v126
    %145 = vmatprep.subr.mxu0 0.0
    %146 = vmatpush1.msra.mxu0 %v127
    %147 = vmatprep.subr.mxu0 0.0
    %148 = vmatpush1.msra.mxu0 0.0
    %149 = vmatprep.subr.mxu0 0.0
    %150 = vmatpush1.msra.mxu0 0.0
    %151 = vmatprep.subr.mxu0 0.0
    %152 = vmatpush1.msra.mxu0 0.0
    %153 = vmatprep.subr.mxu0 0.0
    %154 = vmatpush1.msra.mxu0 0.0
    %155 = vmatprep.subr.mxu0 0.0
    %156 = vmatpush1.msra.mxu0 0.0
    %157 = vmatprep.subr.mxu0 0.0
    %158 = vmatpush1.msra.mxu0 0.0
    %159 = vmatprep.subr.mxu0 0.0
    %160 = vmatpush1.msra.mxu0 0.0
    %161 = vmatprep.subr.mxu0 0.0
    %162 = vmatpush1.msra.mxu0 0.0
    %163 = vmatprep.subr.mxu0 0.0
    %164 = vmatpush1.msra.mxu0 0.0
    %165 = vmatprep.subr.mxu0 0.0
    %166 = vmatpush1.msra.mxu0 0.0
    %167 = vmatprep.subr.mxu0 0.0
    %168 = vmatpush1.msra.mxu0 0.0
    %169 = vmatprep.subr.mxu0 0.0
    %170 = vmatpush1.msra.mxu0 0.0
    %171 = vmatprep.subr.mxu0 0.0
    %172 = vmatpush1.msra.mxu0 0.0
    %173 = vmatprep.subr.mxu0 0.0
    %174 = vmatpush1.msra.mxu0 0.0
    %175 = vmatprep.subr.mxu0 0.0
    %176 = vmatpush1.msra.mxu0 0.0
    %177 = vmatprep.subr.mxu0 0.0
    %178 = vmatpush1.msra.mxu0 0.0
    %179 = vmatprep.subr.mxu0 0.0
    %180 = vmatpush1.msra.mxu0 0.0
    %181 = vmatprep.subr.mxu0 0.0
    %182 = vmatpush1.msra.mxu0 0.0
    %183 = vmatprep.subr.mxu0 0.0
    %184 = vmatpush1.msra.mxu0 0.0
    %185 = vmatprep.subr.mxu0 0.0
    %186 = vmatpush1.msra.mxu0 0.0
    %187 = vmatprep.subr.mxu0 0.0
    %188 = vmatpush1.msra.mxu0 0.0
    %189 = vmatprep.subr.mxu0 0.0
    %190 = vmatpush1.msra.mxu0 0.0
    %191 = vmatprep.subr.mxu0 0.0
    %192 = vmatpush1.msra.mxu0 0.0
    %193 = vmatprep.subr.mxu0 0.0
    %194 = vmatpush1.msra.mxu0 0.0
    %195 = vmatprep.subr.mxu0 0.0
    %196 = vmatpush1.msra.mxu0 0.0
    %197 = vmatprep.subr.mxu0 0.0
    %198 = vmatpush1.msra.mxu0 0.0
    %199 = vmatprep.subr.mxu0 0.0
    %200 = vmatpush1.msra.mxu0 0.0
    %201 = vmatprep.subr.mxu0 0.0
    %202 = vmatpush1.msra.mxu0 0.0
    %203 = vmatprep.mubr.f32.mxu0 0.0
    %204 = vmatmul.mubr.f32.gmra.mrb[0].mxu0 %v137
    %v205 = vpop.f32.mrb[0].mxu0
    %v206 = vadd.f32 %v133, %v205
    %v207 = vpop.f32.mrb[0].mxu0
    %208 = vdwg.mxu0
    %v209 = vld [vmem:[#allocation8] sm:$0xff]
    %v210 = vld [vmem:[#allocation8 + $0x8] sm:$0xff]
    %v211 = vld [vmem:[#allocation8 + $0x10] sm:$0xff]
    %v212 = vld [vmem:[#allocation8 + $0x18] sm:$0xff]
    %v213 = vld [vmem:[#allocation10] sm:$0x1]
    %v215 = vlaneseq
    %v216 = vshrl.u32 %v215, 7
    %v217 = vsub.s32 0, %v216
    %v218 = vrot.slane %v213, %v217
    %220 = vmatprep.subr.mxu0 0.0
    %221 = vmatpush1.msra.mxu0 %v209
    %222 = vmatprep.subr.mxu0 0.0
    %223 = vmatpush1.msra.mxu0 %v210
    %224 = vmatprep.subr.mxu0 0.0
    %225 = vmatpush1.msra.mxu0 %v211
    %226 = vmatprep.subr.mxu0 0.0
    %227 = vmatpush1.msra.mxu0 %v212
    %228 = vmatprep.subr.mxu0 0.0
    %229 = vmatpush1.msra.mxu0 0.0
    %230 = vmatprep.subr.mxu0 0.0
    %231 = vmatpush1.msra.mxu0 0.0
    %232 = vmatprep.subr.mxu0 0.0
    %233 = vmatpush1.msra.mxu0 0.0
    %234 = vmatprep.subr.mxu0 0.0
    %235 = vmatpush1.msra.mxu0 0.0
    %236 = vmatprep.subr.mxu0 0.0
    %237 = vmatpush1.msra.mxu0 0.0
    %238 = vmatprep.subr.mxu0 0.0
    %239 = vmatpush1.msra.mxu0 0.0
    %240 = vmatprep.subr.mxu0 0.0
    %241 = vmatpush1.msra.mxu0 0.0
    %242 = vmatprep.subr.mxu0 0.0
    %243 = vmatpush1.msra.mxu0 0.0
    %244 = vmatprep.subr.mxu0 0.0
    %245 = vmatpush1.msra.mxu0 0.0
    %246 = vmatprep.subr.mxu0 0.0
    %247 = vmatpush1.msra.mxu0 0.0
    %248 = vmatprep.subr.mxu0 0.0
    %249 = vmatpush1.msra.mxu0 0.0
    %250 = vmatprep.subr.mxu0 0.0
    %251 = vmatpush1.msra.mxu0 0.0
    %252 = vmatprep.subr.mxu0 0.0
    %253 = vmatpush1.msra.mxu0 0.0
    %254 = vmatprep.subr.mxu0 0.0
    %255 = vmatpush1.msra.mxu0 0.0
    %256 = vmatprep.subr.mxu0 0.0
    %257 = vmatpush1.msra.mxu0 0.0
    %258 = vmatprep.subr.mxu0 0.0
    %259 = vmatpush1.msra.mxu0 0.0
    %260 = vmatprep.subr.mxu0 0.0
    %261 = vmatpush1.msra.mxu0 0.0
    %262 = vmatprep.subr.mxu0 0.0
    %263 = vmatpush1.msra.mxu0 0.0
    %264 = vmatprep.subr.mxu0 0.0
    %265 = vmatpush1.msra.mxu0 0.0
    %266 = vmatprep.subr.mxu0 0.0
    %267 = vmatpush1.msra.mxu0 0.0
    %268 = vmatprep.subr.mxu0 0.0
    %269 = vmatpush1.msra.mxu0 0.0
    %270 = vmatprep.subr.mxu0 0.0
    %271 = vmatpush1.msra.mxu0 0.0
    %272 = vmatprep.subr.mxu0 0.0
    %273 = vmatpush1.msra.mxu0 0.0
    %274 = vmatprep.subr.mxu0 0.0
    %275 = vmatpush1.msra.mxu0 0.0
    %276 = vmatprep.subr.mxu0 0.0
    %277 = vmatpush1.msra.mxu0 0.0
    %278 = vmatprep.subr.mxu0 0.0
    %279 = vmatpush1.msra.mxu0 0.0
    %280 = vmatprep.subr.mxu0 0.0
    %281 = vmatpush1.msra.mxu0 0.0
    %282 = vmatprep.subr.mxu0 0.0
    %283 = vmatpush1.msra.mxu0 0.0
    %284 = vmatprep.mubr.f32.mxu0 0.0
    %285 = vmatmul.mubr.f32.gmra.mrb[0].mxu0 %v137
    %v286 = vpop.f32.mrb[0].mxu0
    %v287 = vadd.f32 %v218, %v286
    %v288 = vpop.f32.mrb[0].mxu0
    %289 = vdwg.mxu0
    %v290 = vld [vmem:[%s11] sm:$0xff]
    %v291 = vld [vmem:[%s11 + $0x8] sm:$0xff]
    %v292 = vld [vmem:[%s11 + $0x10] sm:$0xff]
    %v293 = vld [vmem:[%s11 + $0x18] sm:$0xff]
    %v294 = vld [vmem:[%s12] sm:$0x1]
    %v296 = vlaneseq
    %v297 = vshrl.u32 %v296, 7
    %v298 = vsub.s32 0, %v297
    %v299 = vrot.slane %v294, %v298
    %301 = vmatprep.subr.mxu0 0.0
    %302 = vmatpush1.msra.mxu0 %v290
    %303 = vmatprep.subr.mxu0 0.0
    %304 = vmatpush1.msra.mxu0 %v291
    %305 = vmatprep.subr.mxu0 0.0
    %306 = vmatpush1.msra.mxu0 %v292
    %307 = vmatprep.subr.mxu0 0.0
    %308 = vmatpush1.msra.mxu0 %v293
    %309 = vmatprep.subr.mxu0 0.0
    %310 = vmatpush1.msra.mxu0 0.0
    %311 = vmatprep.subr.mxu0 0.0
    %312 = vmatpush1.msra.mxu0 0.0
    %313 = vmatprep.subr.mxu0 0.0
    %314 = vmatpush1.msra.mxu0 0.0
    %315 = vmatprep.subr.mxu0 0.0
    %316 = vmatpush1.msra.mxu0 0.0
    %317 = vmatprep.subr.mxu0 0.0
    %318 = vmatpush1.msra.mxu0 0.0
    %319 = vmatprep.subr.mxu0 0.0
    %320 = vmatpush1.msra.mxu0 0.0
    %321 = vmatprep.subr.mxu0 0.0
    %322 = vmatpush1.msra.mxu0 0.0
    %323 = vmatprep.subr.mxu0 0.0
    %324 = vmatpush1.msra.mxu0 0.0
    %325 = vmatprep.subr.mxu0 0.0
    %326 = vmatpush1.msra.mxu0 0.0
    %327 = vmatprep.subr.mxu0 0.0
    %328 = vmatpush1.msra.mxu0 0.0
    %329 = vmatprep.subr.mxu0 0.0
    %330 = vmatpush1.msra.mxu0 0.0
    %331 = vmatprep.subr.mxu0 0.0
    %332 = vmatpush1.msra.mxu0 0.0
    %333 = vmatprep.subr.mxu0 0.0
    %334 = vmatpush1.msra.mxu0 0.0
    %335 = vmatprep.subr.mxu0 0.0
    %336 = vmatpush1.msra.mxu0 0.0
    %337 = vmatprep.subr.mxu0 0.0
    %338 = vmatpush1.msra.mxu0 0.0
    %339 = vmatprep.subr.mxu0 0.0
    %340 = vmatpush1.msra.mxu0 0.0
    %341 = vmatprep.subr.mxu0 0.0
    %342 = vmatpush1.msra.mxu0 0.0
    %343 = vmatprep.subr.mxu0 0.0
    %344 = vmatpush1.msra.mxu0 0.0
    %345 = vmatprep.subr.mxu0 0.0
    %346 = vmatpush1.msra.mxu0 0.0
    %347 = vmatprep.subr.mxu0 0.0
    %348 = vmatpush1.msra.mxu0 0.0
    %349 = vmatprep.subr.mxu0 0.0
    %350 = vmatpush1.msra.mxu0 0.0
    %351 = vmatprep.subr.mxu0 0.0
    %352 = vmatpush1.msra.mxu0 0.0
    %353 = vmatprep.subr.mxu0 0.0
    %354 = vmatpush1.msra.mxu0 0.0
    %355 = vmatprep.subr.mxu0 0.0
    %356 = vmatpush1.msra.mxu0 0.0
    %357 = vmatprep.subr.mxu0 0.0
    %358 = vmatpush1.msra.mxu0 0.0
    %359 = vmatprep.subr.mxu0 0.0
    %360 = vmatpush1.msra.mxu0 0.0
    %361 = vmatprep.subr.mxu0 0.0
    %362 = vmatpush1.msra.mxu0 0.0
    %363 = vmatprep.subr.mxu0 0.0
    %364 = vmatpush1.msra.mxu0 0.0
    %365 = vmatprep.mubr.f32.mxu0 0.0
    %366 = vmatmul.mubr.f32.gmra.mrb[0].mxu0 %v137
    %v367 = vpop.f32.mrb[0].mxu0
    %v368 = vadd.f32 %v299, %v367
    %v369 = vpop.f32.mrb[0].mxu0
    %370 = vdwg.mxu0
    %v371 = vld [vmem:[#allocation5] sm:$0xff]
    %v372 = vld [vmem:[#allocation5 + $0x8] sm:$0xff]
    %v373 = vld [vmem:[#allocation5 + $0x10] sm:$0xff]
    %v374 = vld [vmem:[#allocation5 + $0x18] sm:$0xff]
    %v375 = vld [vmem:[%s3] sm:$0x1]
    %v377 = vlaneseq
    %v378 = vshrl.u32 %v377, 7
    %v379 = vsub.s32 0, %v378
    %v380 = vrot.slane %v375, %v379
    %382 = vmatprep.subr.mxu0 0.0
    %383 = vmatpush1.msra.mxu0 %v371
    %384 = vmatprep.subr.mxu0 0.0
    %385 = vmatpush1.msra.mxu0 %v372
    %386 = vmatprep.subr.mxu0 0.0
    %387 = vmatpush1.msra.mxu0 %v373
    %388 = vmatprep.subr.mxu0 0.0
    %389 = vmatpush1.msra.mxu0 %v374
    %390 = vmatprep.subr.mxu0 0.0
    %391 = vmatpush1.msra.mxu0 0.0
    %392 = vmatprep.subr.mxu0 0.0
    %393 = vmatpush1.msra.mxu0 0.0
    %394 = vmatprep.subr.mxu0 0.0
    %395 = vmatpush1.msra.mxu0 0.0
    %396 = vmatprep.subr.mxu0 0.0
    %397 = vmatpush1.msra.mxu0 0.0
    %398 = vmatprep.subr.mxu0 0.0
    %399 = vmatpush1.msra.mxu0 0.0
    %400 = vmatprep.subr.mxu0 0.0
    %401 = vmatpush1.msra.mxu0 0.0
    %402 = vmatprep.subr.mxu0 0.0
    %403 = vmatpush1.msra.mxu0 0.0
    %404 = vmatprep.subr.mxu0 0.0
    %405 = vmatpush1.msra.mxu0 0.0
    %406 = vmatprep.subr.mxu0 0.0
    %407 = vmatpush1.msra.mxu0 0.0
    %408 = vmatprep.subr.mxu0 0.0
    %409 = vmatpush1.msra.mxu0 0.0
    %410 = vmatprep.subr.mxu0 0.0
    %411 = vmatpush1.msra.mxu0 0.0
    %412 = vmatprep.subr.mxu0 0.0
    %413 = vmatpush1.msra.mxu0 0.0
    %414 = vmatprep.subr.mxu0 0.0
    %415 = vmatpush1.msra.mxu0 0.0
    %416 = vmatprep.subr.mxu0 0.0
    %417 = vmatpush1.msra.mxu0 0.0
    %418 = vmatprep.subr.mxu0 0.0
    %419 = vmatpush1.msra.mxu0 0.0
    %420 = vmatprep.subr.mxu0 0.0
    %421 = vmatpush1.msra.mxu0 0.0
    %422 = vmatprep.subr.mxu0 0.0
    %423 = vmatpush1.msra.mxu0 0.0
    %424 = vmatprep.subr.mxu0 0.0
    %425 = vmatpush1.msra.mxu0 0.0
    %426 = vmatprep.subr.mxu0 0.0
    %427 = vmatpush1.msra.mxu0 0.0
    %428 = vmatprep.subr.mxu0 0.0
    %429 = vmatpush1.msra.mxu0 0.0
    %430 = vmatprep.subr.mxu0 0.0
    %431 = vmatpush1.msra.mxu0 0.0
    %432 = vmatprep.subr.mxu0 0.0
    %433 = vmatpush1.msra.mxu0 0.0
    %434 = vmatprep.subr.mxu0 0.0
    %435 = vmatpush1.msra.mxu0 0.0
    %436 = vmatprep.subr.mxu0 0.0
    %437 = vmatpush1.msra.mxu0 0.0
    %438 = vmatprep.subr.mxu0 0.0
    %439 = vmatpush1.msra.mxu0 0.0
    %440 = vmatprep.subr.mxu0 0.0
    %441 = vmatpush1.msra.mxu0 0.0
    %442 = vmatprep.subr.mxu0 0.0
    %443 = vmatpush1.msra.mxu0 0.0
    %444 = vmatprep.subr.mxu0 0.0
    %445 = vmatpush1.msra.mxu0 0.0
    %446 = vmatprep.mubr.f32.mxu0 0.0
    %447 = vmatmul.mubr.f32.gmra.mrb[0].mxu0 %v137
    %v448 = vpop.f32.mrb[0].mxu0
    %v449 = vadd.f32 %v380, %v448
    %v450 = vpop.f32.mrb[0].mxu0
    %451 = vdwg.mxu0
    %v452 = vtanh.pop %v449
    %v453 = vld [vmem:[#allocation11] sm:$0xff]
    %v454 = vld [vmem:[#allocation11 + $0x8] sm:$0xff]
    %v455 = vld [vmem:[#allocation11 + $0x10] sm:$0xff]
    %v456 = vld [vmem:[#allocation11 + $0x18] sm:$0xff]
    %v457 = vld [vmem:[%s9] sm:$0xff]
    %v458 = vld [vmem:[%s9 + $0x8] sm:$0xff]
    %v459 = vld [vmem:[%s9 + $0x10] sm:$0xff]
    %v460 = vld [vmem:[%s9 + $0x18] sm:$0xff]
    %v461 = vld [vmem:[%s9 + $0x20] sm:$0xff]
    %v462 = vld [vmem:[%s9 + $0x28] sm:$0xff]
    %v463 = vld [vmem:[%s9 + $0x30] sm:$0xff]
    %v464 = vld [vmem:[%s9 + $0x38] sm:$0xff]
    %v465 = vld [vmem:[%s10] sm:$0xff]
    %v466 = vld [vmem:[%s10 + $0x8] sm:$0xff]
    %v467 = vld [vmem:[%s10 + $0x10] sm:$0xff]
    %v468 = vld [vmem:[%s10 + $0x18] sm:$0xff]
    %v470 = vsel %vm135, %v452, 0
    %472 = vmatprep.subr.mxu0 0.0
    %473 = vmatpush1.msra.mxu0 %v453
    %474 = vmatprep.subr.mxu0 0.0
    %475 = vmatpush1.msra.mxu0 %v454
    %476 = vmatprep.subr.mxu0 0.0
    %477 = vmatpush1.msra.mxu0 %v455
    %478 = vmatprep.subr.mxu0 0.0
    %479 = vmatpush1.msra.mxu0 %v456
    %480 = vmatprep.subr.mxu0 0.0
    %481 = vmatpush1.msra.mxu0 0.0
    %482 = vmatprep.subr.mxu0 0.0
    %483 = vmatpush1.msra.mxu0 0.0
    %484 = vmatprep.subr.mxu0 0.0
    %485 = vmatpush1.msra.mxu0 0.0
    %486 = vmatprep.subr.mxu0 0.0
    %487 = vmatpush1.msra.mxu0 0.0
    %488 = vmatprep.subr.mxu0 0.0
    %489 = vmatpush1.msra.mxu0 0.0
    %490 = vmatprep.subr.mxu0 0.0
    %491 = vmatpush1.msra.mxu0 0.0
    %492 = vmatprep.subr.mxu0 0.0
    %493 = vmatpush1.msra.mxu0 0.0
    %494 = vmatprep.subr.mxu0 0.0
    %495 = vmatpush1.msra.mxu0 0.0
    %496 = vmatprep.subr.mxu0 0.0
    %497 = vmatpush1.msra.mxu0 0.0
    %498 = vmatprep.subr.mxu0 0.0
    %499 = vmatpush1.msra.mxu0 0.0
    %500 = vmatprep.subr.mxu0 0.0
    %501 = vmatpush1.msra.mxu0 0.0
    %502 = vmatprep.subr.mxu0 0.0
    %503 = vmatpush1.msra.mxu0 0.0
    %504 = vmatprep.subr.mxu0 0.0
    %505 = vmatpush1.msra.mxu0 0.0
    %506 = vmatprep.subr.mxu0 0.0
    %507 = vmatpush1.msra.mxu0 0.0
    %508 = vmatprep.subr.mxu0 0.0
    %509 = vmatpush1.msra.mxu0 0.0
    %510 = vmatprep.subr.mxu0 0.0
    %511 = vmatpush1.msra.mxu0 0.0
    %512 = vmatprep.subr.mxu0 0.0
    %513 = vmatpush1.msra.mxu0 0.0
    %514 = vmatprep.subr.mxu0 0.0
    %515 = vmatpush1.msra.mxu0 0.0
    %516 = vmatprep.subr.mxu0 0.0
    %517 = vmatpush1.msra.mxu0 0.0
    %518 = vmatprep.subr.mxu0 0.0
    %519 = vmatpush1.msra.mxu0 0.0
    %520 = vmatprep.subr.mxu0 0.0
    %521 = vmatpush1.msra.mxu0 0.0
    %522 = vmatprep.subr.mxu0 0.0
    %523 = vmatpush1.msra.mxu0 0.0
    %524 = vmatprep.subr.mxu0 0.0
    %525 = vmatpush1.msra.mxu0 0.0
    %526 = vmatprep.subr.mxu0 0.0
    %527 = vmatpush1.msra.mxu0 0.0
    %528 = vmatprep.subr.mxu0 0.0
    %529 = vmatpush1.msra.mxu0 0.0
    %530 = vmatprep.subr.mxu0 0.0
    %531 = vmatpush1.msra.mxu0 0.0
    %532 = vmatprep.subr.mxu0 0.0
    %533 = vmatpush1.msra.mxu0 0.0
    %534 = vmatprep.subr.mxu0 0.0
    %535 = vmatpush1.msra.mxu0 0.0
    %536 = vmatprep.mubr.f32.mxu0 0.0
    %537 = vmatmul.mubr.f32.gmra.mrb[0].mxu0 %v470
    %v538 = vpop.f32.mrb[0].mxu0
    %v539 = vadd.f32 %v206, %v538
    %v540 = vpop.f32.mrb[0].mxu0
    %541 = vdwg.mxu0
    %v542 = vmul.f32 %v539, 0.5
    %v543 = vtanh.pop %v542
    %v544 = vadd.f32 %v543, 1.0
    %v545 = vmul.f32 %v544, 0.5
    %v546 = vtanh.pop %v539
    %547 = vrot.lane.b32.xlu0 %v452, 32
    %v548 = vpop.permute.xlu0 %547
    %v550 = vmul.f32 %v545, %v548
    %552 = vrot.lane.b32.xlu0 %v546, 32
    %v553 = vpop.permute.xlu0 %552
    %v555 = vmul.f32 %v545, %v553
    %557 = vrot.lane.b32.xlu0 %v555, 32
    %v558 = vpop.permute.xlu0 %557
    %v560 = vadd.f32 %v550, %v558
    %v561 = vtanh.pop %v560
    %563 = vrot.lane.b32.xlu0 %v561, 32
    %v564 = vpop.permute.xlu0 %563
    %v566 = vmul.f32 %v545, %v564
    %568 = vrot.lane.b32.xlu0 %v566, 64
    %v569 = vpop.permute.xlu0 %568
    %v570 = vsel %vm135, %v569, 0
    %572 = vmatprep.subr.mxu0 0.0
    %573 = vmatpush1.msra.mxu0 %v465
    %574 = vmatprep.subr.mxu0 0.0
    %575 = vmatpush1.msra.mxu0 %v466
    %576 = vmatprep.subr.mxu0 0.0
    %577 = vmatpush1.msra.mxu0 %v467
    %578 = vmatprep.subr.mxu0 0.0
    %579 = vmatpush1.msra.mxu0 %v468
    %580 = vmatprep.subr.mxu0 0.0
    %581 = vmatpush1.msra.mxu0 0.0
    %582 = vmatprep.subr.mxu0 0.0
    %583 = vmatpush1.msra.mxu0 0.0
    %584 = vmatprep.subr.mxu0 0.0
    %585 = vmatpush1.msra.mxu0 0.0
    %586 = vmatprep.subr.mxu0 0.0
    %587 = vmatpush1.msra.mxu0 0.0
    %588 = vmatprep.subr.mxu0 0.0
    %589 = vmatpush1.msra.mxu0 0.0
    %590 = vmatprep.subr.mxu0 0.0
    %591 = vmatpush1.msra.mxu0 0.0
    %592 = vmatprep.subr.mxu0 0.0
    %593 = vmatpush1.msra.mxu0 0.0
    %594 = vmatprep.subr.mxu0 0.0
    %595 = vmatpush1.msra.mxu0 0.0
    %596 = vmatprep.subr.mxu0 0.0
    %597 = vmatpush1.msra.mxu0 0.0
    %598 = vmatprep.subr.mxu0 0.0
    %599 = vmatpush1.msra.mxu0 0.0
    %600 = vmatprep.subr.mxu0 0.0
    %601 = vmatpush1.msra.mxu0 0.0
    %602 = vmatprep.subr.mxu0 0.0
    %603 = vmatpush1.msra.mxu0 0.0
    %604 = vmatprep.subr.mxu0 0.0
    %605 = vmatpush1.msra.mxu0 0.0
    %606 = vmatprep.subr.mxu0 0.0
    %607 = vmatpush1.msra.mxu0 0.0
    %608 = vmatprep.subr.mxu0 0.0
    %609 = vmatpush1.msra.mxu0 0.0
    %610 = vmatprep.subr.mxu0 0.0
    %611 = vmatpush1.msra.mxu0 0.0
    %612 = vmatprep.subr.mxu0 0.0
    %613 = vmatpush1.msra.mxu0 0.0
    %614 = vmatprep.subr.mxu0 0.0
    %615 = vmatpush1.msra.mxu0 0.0
    %616 = vmatprep.subr.mxu0 0.0
    %617 = vmatpush1.msra.mxu0 0.0
    %618 = vmatprep.subr.mxu0 0.0
    %619 = vmatpush1.msra.mxu0 0.0
    %620 = vmatprep.subr.mxu0 0.0
    %621 = vmatpush1.msra.mxu0 0.0
    %622 = vmatprep.subr.mxu0 0.0
    %623 = vmatpush1.msra.mxu0 0.0
    %624 = vmatprep.subr.mxu0 0.0
    %625 = vmatpush1.msra.mxu0 0.0
    %626 = vmatprep.subr.mxu0 0.0
    %627 = vmatpush1.msra.mxu0 0.0
    %628 = vmatprep.subr.mxu0 0.0
    %629 = vmatpush1.msra.mxu0 0.0
    %630 = vmatprep.subr.mxu0 0.0
    %631 = vmatpush1.msra.mxu0 0.0
    %632 = vmatprep.subr.mxu0 0.0
    %633 = vmatpush1.msra.mxu0 0.0
    %634 = vmatprep.subr.mxu0 0.0
    %635 = vmatpush1.msra.mxu0 0.0
    %636 = vmatprep.mubr.f32.mxu0 0.0
    %637 = vmatmul.mubr.f32.gmra.mrb[0].mxu0 %v570
    %v638 = vpop.f32.mrb[0].mxu0
    %v639 = vadd.f32 %v368, %v638
    %v640 = vpop.f32.mrb[0].mxu0
    %641 = vdwg.mxu0
    %vm642 = vcmask 125952
    %643 = vst.msk [vmem:[#allocation13] sm:$0xf] %vm642, %v639
    %644 = vmatprep.subr.mxu0 %v458
    %645 = vmatpush1.msra.mxu0 %v457
    %646 = vmatprep.subr.mxu0 %v460
    %647 = vmatpush1.msra.mxu0 %v459
    %648 = vmatprep.subr.mxu0 %v462
    %649 = vmatpush1.msra.mxu0 %v461
    %650 = vmatprep.subr.mxu0 %v464
    %651 = vmatpush1.msra.mxu0 %v463
    %652 = vmatprep.subr.mxu0 0.0
    %653 = vmatpush1.msra.mxu0 0.0
    %654 = vmatprep.subr.mxu0 0.0
    %655 = vmatpush1.msra.mxu0 0.0
    %656 = vmatprep.subr.mxu0 0.0
    %657 = vmatpush1.msra.mxu0 0.0
    %658 = vmatprep.subr.mxu0 0.0
    %659 = vmatpush1.msra.mxu0 0.0
    %660 = vmatprep.subr.mxu0 0.0
    %661 = vmatpush1.msra.mxu0 0.0
    %662 = vmatprep.subr.mxu0 0.0
    %663 = vmatpush1.msra.mxu0 0.0
    %664 = vmatprep.subr.mxu0 0.0
    %665 = vmatpush1.msra.mxu0 0.0
    %666 = vmatprep.subr.mxu0 0.0
    %667 = vmatpush1.msra.mxu0 0.0
    %668 = vmatprep.subr.mxu0 0.0
    %669 = vmatpush1.msra.mxu0 0.0
    %670 = vmatprep.subr.mxu0 0.0
    %671 = vmatpush1.msra.mxu0 0.0
    %672 = vmatprep.subr.mxu0 0.0
    %673 = vmatpush1.msra.mxu0 0.0
    %674 = vmatprep.subr.mxu0 0.0
    %675 = vmatpush1.msra.mxu0 0.0
    %676 = vmatprep.subr.mxu0 0.0
    %677 = vmatpush1.msra.mxu0 0.0
    %678 = vmatprep.subr.mxu0 0.0
    %679 = vmatpush1.msra.mxu0 0.0
    %680 = vmatprep.subr.mxu0 0.0
    %681 = vmatpush1.msra.mxu0 0.0
    %682 = vmatprep.subr.mxu0 0.0
    %683 = vmatpush1.msra.mxu0 0.0
    %684 = vmatprep.subr.mxu0 0.0
    %685 = vmatpush1.msra.mxu0 0.0
    %686 = vmatprep.subr.mxu0 0.0
    %687 = vmatpush1.msra.mxu0 0.0
    %688 = vmatprep.subr.mxu0 0.0
    %689 = vmatpush1.msra.mxu0 0.0
    %690 = vmatprep.subr.mxu0 0.0
    %691 = vmatpush1.msra.mxu0 0.0
    %692 = vmatprep.subr.mxu0 0.0
    %693 = vmatpush1.msra.mxu0 0.0
    %694 = vmatprep.subr.mxu0 0.0
    %695 = vmatpush1.msra.mxu0 0.0
    %696 = vmatprep.subr.mxu0 0.0
    %697 = vmatpush1.msra.mxu0 0.0
    %698 = vmatprep.subr.mxu0 0.0
    %699 = vmatpush1.msra.mxu0 0.0
    %700 = vmatprep.subr.mxu0 0.0
    %701 = vmatpush1.msra.mxu0 0.0
    %702 = vmatprep.subr.mxu0 0.0
    %703 = vmatpush1.msra.mxu0 0.0
    %704 = vmatprep.subr.mxu0 0.0
    %705 = vmatpush1.msra.mxu0 0.0
    %706 = vmatprep.subr.mxu0 0.0
    %707 = vmatpush1.msra.mxu0 0.0
    %708 = vmatprep.mubr.f32.mxu0 0.0
    %709 = vmatmul.mubr.f32.gmra.mrb[0].mxu0 %v570
    %v710 = vpop.f32.mrb[0].mxu0
    %v711 = vadd.f32 0.0, %v710
    %v712 = vpop.f32.mrb[0].mxu0
    %v713 = vadd.f32 0.0, %v712
    %714 = vdwg.mxu0
    %v715 = vadd.f32 %v711, %v713
    %v716 = vadd.f32 %v715, %v287
    %v717 = vmul.f32 %v716, 0.5
    %v718 = vtanh.pop %v717
    %v719 = vadd.f32 %v718, 1.0
    %v720 = vmul.f32 %v719, 0.5
    %v721 = vtanh.pop %v716
    %v722 = vmul.f32 %v720, %v560
    %724 = vrot.lane.b32.xlu0 %v721, 32
    %v725 = vpop.permute.xlu0 %724
    %v727 = vmul.f32 %v720, %v725
    %729 = vrot.lane.b32.xlu0 %v727, 32
    %v730 = vpop.permute.xlu0 %729
    %v732 = vadd.f32 %v722, %v730
    %v733 = vtanh.pop %v732
    %735 = vrot.lane.b32.xlu0 %v733, 32
    %v736 = vpop.permute.xlu0 %735
    %v738 = vmul.f32 %v720, %v736
    %740 = vrot.lane.b32.xlu0 %v738, 64
    %v741 = vpop.permute.xlu0 %740
    %v742 = vsel %vm135, %v741, 0
    %744 = vmatprep.subr.mxu0 0.0
    %745 = vmatpush1.msra.mxu0 %v465
    %746 = vmatprep.subr.mxu0 0.0
    %747 = vmatpush1.msra.mxu0 %v466
    %748 = vmatprep.subr.mxu0 0.0
    %749 = vmatpush1.msra.mxu0 %v467
    %750 = vmatprep.subr.mxu0 0.0
    %751 = vmatpush1.msra.mxu0 %v468
    %752 = vmatprep.subr.mxu0 0.0
    %753 = vmatpush1.msra.mxu0 0.0
    %754 = vmatprep.subr.mxu0 0.0
    %755 = vmatpush1.msra.mxu0 0.0
    %756 = vmatprep.subr.mxu0 0.0
    %757 = vmatpush1.msra.mxu0 0.0
    %758 = vmatprep.subr.mxu0 0.0
    %759 = vmatpush1.msra.mxu0 0.0
    %760 = vmatprep.subr.mxu0 0.0
    %761 = vmatpush1.msra.mxu0 0.0
    %762 = vmatprep.subr.mxu0 0.0
    %763 = vmatpush1.msra.mxu0 0.0
    %764 = vmatprep.subr.mxu0 0.0
    %765 = vmatpush1.msra.mxu0 0.0
    %766 = vmatprep.subr.mxu0 0.0
    %767 = vmatpush1.msra.mxu0 0.0
    %768 = vmatprep.subr.mxu0 0.0
    %769 = vmatpush1.msra.mxu0 0.0
    %770 = vmatprep.subr.mxu0 0.0
    %771 = vmatpush1.msra.mxu0 0.0
    %772 = vmatprep.subr.mxu0 0.0
    %773 = vmatpush1.msra.mxu0 0.0
    %774 = vmatprep.subr.mxu0 0.0
    %775 = vmatpush1.msra.mxu0 0.0
    %776 = vmatprep.subr.mxu0 0.0
    %777 = vmatpush1.msra.mxu0 0.0
    %778 = vmatprep.subr.mxu0 0.0
    %779 = vmatpush1.msra.mxu0 0.0
    %780 = vmatprep.subr.mxu0 0.0
    %781 = vmatpush1.msra.mxu0 0.0
    %782 = vmatprep.subr.mxu0 0.0
    %783 = vmatpush1.msra.mxu0 0.0
    %784 = vmatprep.subr.mxu0 0.0
    %785 = vmatpush1.msra.mxu0 0.0
    %786 = vmatprep.subr.mxu0 0.0
    %787 = vmatpush1.msra.mxu0 0.0
    %788 = vmatprep.subr.mxu0 0.0
    %789 = vmatpush1.msra.mxu0 0.0
    %790 = vmatprep.subr.mxu0 0.0
    %791 = vmatpush1.msra.mxu0 0.0
    %792 = vmatprep.subr.mxu0 0.0
    %793 = vmatpush1.msra.mxu0 0.0
    %794 = vmatprep.subr.mxu0 0.0
    %795 = vmatpush1.msra.mxu0 0.0
    %796 = vmatprep.subr.mxu0 0.0
    %797 = vmatpush1.msra.mxu0 0.0
    %798 = vmatprep.subr.mxu0 0.0
    %799 = vmatpush1.msra.mxu0 0.0
    %800 = vmatprep.subr.mxu0 0.0
    %801 = vmatpush1.msra.mxu0 0.0
    %802 = vmatprep.subr.mxu0 0.0
    %803 = vmatpush1.msra.mxu0 0.0
    %804 = vmatprep.subr.mxu0 0.0
    %805 = vmatpush1.msra.mxu0 0.0
    %806 = vmatprep.subr.mxu0 0.0
    %807 = vmatpush1.msra.mxu0 0.0
    %808 = vmatprep.mubr.f32.mxu0 0.0
    %809 = vmatmul.mubr.f32.gmra.mrb[0].mxu0 %v742
    %v810 = vpop.f32.mrb[0].mxu0
    %v811 = vadd.f32 %v368, %v810
    %v812 = vpop.f32.mrb[0].mxu0
    %813 = vdwg.mxu0
    %815 = vrot.lane.b32.xlu0 %v811, 16
    %v816 = vpop.permute.xlu0 %815
    %vm818 = vcmask 257152
    %819 = vst.msk [vmem:[#allocation13] sm:$0xf] %vm818, %v816
    %820 = vmatprep.subr.mxu0 %v458
    %821 = vmatpush1.msra.mxu0 %v457
    %822 = vmatprep.subr.mxu0 %v460
    %823 = vmatpush1.msra.mxu0 %v459
    %824 = vmatprep.subr.mxu0 %v462
    %825 = vmatpush1.msra.mxu0 %v461
    %826 = vmatprep.subr.mxu0 %v464
    %827 = vmatpush1.msra.mxu0 %v463
    %828 = vmatprep.subr.mxu0 0.0
    %829 = vmatpush1.msra.mxu0 0.0
    %830 = vmatprep.subr.mxu0 0.0
    %831 = vmatpush1.msra.mxu0 0.0
    %832 = vmatprep.subr.mxu0 0.0
    %833 = vmatpush1.msra.mxu0 0.0
    %834 = vmatprep.subr.mxu0 0.0
    %835 = vmatpush1.msra.mxu0 0.0
    %836 = vmatprep.subr.mxu0 0.0
    %837 = vmatpush1.msra.mxu0 0.0
    %838 = vmatprep.subr.mxu0 0.0
    %839 = vmatpush1.msra.mxu0 0.0
    %840 = vmatprep.subr.mxu0 0.0
    %841 = vmatpush1.msra.mxu0 0.0
    %842 = vmatprep.subr.mxu0 0.0
    %843 = vmatpush1.msra.mxu0 0.0
    %844 = vmatprep.subr.mxu0 0.0
    %845 = vmatpush1.msra.mxu0 0.0
    %846 = vmatprep.subr.mxu0 0.0
    %847 = vmatpush1.msra.mxu0 0.0
    %848 = vmatprep.subr.mxu0 0.0
    %849 = vmatpush1.msra.mxu0 0.0
    %850 = vmatprep.subr.mxu0 0.0
    %851 = vmatpush1.msra.mxu0 0.0
    %852 = vmatprep.subr.mxu0 0.0
    %853 = vmatpush1.msra.mxu0 0.0
    %854 = vmatprep.subr.mxu0 0.0
    %855 = vmatpush1.msra.mxu0 0.0
    %856 = vmatprep.subr.mxu0 0.0
    %857 = vmatpush1.msra.mxu0 0.0
    %858 = vmatprep.subr.mxu0 0.0
    %859 = vmatpush1.msra.mxu0 0.0
    %860 = vmatprep.subr.mxu0 0.0
    %861 = vmatpush1.msra.mxu0 0.0
    %862 = vmatprep.subr.mxu0 0.0
    %863 = vmatpush1.msra.mxu0 0.0
    %864 = vmatprep.subr.mxu0 0.0
    %865 = vmatpush1.msra.mxu0 0.0
    %866 = vmatprep.subr.mxu0 0.0
    %867 = vmatpush1.msra.mxu0 0.0
    %868 = vmatprep.subr.mxu0 0.0
    %869 = vmatpush1.msra.mxu0 0.0
    %870 = vmatprep.subr.mxu0 0.0
    %871 = vmatpush1.msra.mxu0 0.0
    %872 = vmatprep.subr.mxu0 0.0
    %873 = vmatpush1.msra.mxu0 0.0
    %874 = vmatprep.subr.mxu0 0.0
    %875 = vmatpush1.msra.mxu0 0.0
    %876 = vmatprep.subr.mxu0 0.0
    %877 = vmatpush1.msra.mxu0 0.0
    %878 = vmatprep.subr.mxu0 0.0
    %879 = vmatpush1.msra.mxu0 0.0
    %880 = vmatprep.subr.mxu0 0.0
    %881 = vmatpush1.msra.mxu0 0.0
    %882 = vmatprep.subr.mxu0 0.0
    %883 = vmatpush1.msra.mxu0 0.0
    %884 = vmatprep.mubr.f32.mxu0 0.0
    %885 = vmatmul.mubr.f32.gmra.mrb[0].mxu0 %v742
    %v886 = vpop.f32.mrb[0].mxu0
    %v887 = vadd.f32 0.0, %v886
    %v888 = vpop.f32.mrb[0].mxu0
    %v889 = vadd.f32 0.0, %v888
    %890 = vdwg.mxu0
    %v891 = vadd.f32 %v887, %v889
    %v892 = vadd.f32 %v891, %v287
    %v893 = vmul.f32 %v892, 0.5
    %v894 = vtanh.pop %v893
    %v895 = vadd.f32 %v894, 1.0
    %v896 = vmul.f32 %v895, 0.5
    %v897 = vtanh.pop %v892
    %v898 = vmul.f32 %v896, %v732
    %900 = vrot.lane.b32.xlu0 %v897, 32
    %v901 = vpop.permute.xlu0 %900
    %v903 = vmul.f32 %v896, %v901
    %905 = vrot.lane.b32.xlu0 %v903, 32
    %v906 = vpop.permute.xlu0 %905
    %v908 = vadd.f32 %v898, %v906
    %v909 = vtanh.pop %v908
    %911 = vrot.lane.b32.xlu0 %v909, 32
    %v912 = vpop.permute.xlu0 %911
    %v914 = vmul.f32 %v896, %v912
    %916 = vrot.lane.b32.xlu0 %v914, 64
    %v917 = vpop.permute.xlu0 %916
    %v918 = vsel %vm135, %v917, 0
    %920 = vmatprep.subr.mxu0 0.0
    %921 = vmatpush1.msra.mxu0 %v465
    %922 = vmatprep.subr.mxu0 0.0
    %923 = vmatpush1.msra.mxu0 %v466
    %924 = vmatprep.subr.mxu0 0.0
    %925 = vmatpush1.msra.mxu0 %v467
    %926 = vmatprep.subr.mxu0 0.0
    %927 = vmatpush1.msra.mxu0 %v468
    %928 = vmatprep.subr.mxu0 0.0
    %929 = vmatpush1.msra.mxu0 0.0
    %930 = vmatprep.subr.mxu0 0.0
    %931 = vmatpush1.msra.mxu0 0.0
    %932 = vmatprep.subr.mxu0 0.0
    %933 = vmatpush1.msra.mxu0 0.0
    %934 = vmatprep.subr.mxu0 0.0
    %935 = vmatpush1.msra.mxu0 0.0
    %936 = vmatprep.subr.mxu0 0.0
    %937 = vmatpush1.msra.mxu0 0.0
    %938 = vmatprep.subr.mxu0 0.0
    %939 = vmatpush1.msra.mxu0 0.0
    %940 = vmatprep.subr.mxu0 0.0
    %941 = vmatpush1.msra.mxu0 0.0
    %942 = vmatprep.subr.mxu0 0.0
    %943 = vmatpush1.msra.mxu0 0.0
    %944 = vmatprep.subr.mxu0 0.0
    %945 = vmatpush1.msra.mxu0 0.0
    %946 = vmatprep.subr.mxu0 0.0
    %947 = vmatpush1.msra.mxu0 0.0
    %948 = vmatprep.subr.mxu0 0.0
    %949 = vmatpush1.msra.mxu0 0.0
    %950 = vmatprep.subr.mxu0 0.0
    %951 = vmatpush1.msra.mxu0 0.0
    %952 = vmatprep.subr.mxu0 0.0
    %953 = vmatpush1.msra.mxu0 0.0
    %954 = vmatprep.subr.mxu0 0.0
    %955 = vmatpush1.msra.mxu0 0.0
    %956 = vmatprep.subr.mxu0 0.0
    %957 = vmatpush1.msra.mxu0 0.0
    %958 = vmatprep.subr.mxu0 0.0
    %959 = vmatpush1.msra.mxu0 0.0
    %960 = vmatprep.subr.mxu0 0.0
    %961 = vmatpush1.msra.mxu0 0.0
    %962 = vmatprep.subr.mxu0 0.0
    %963 = vmatpush1.msra.mxu0 0.0
    %964 = vmatprep.subr.mxu0 0.0
    %965 = vmatpush1.msra.mxu0 0.0
    %966 = vmatprep.subr.mxu0 0.0
    %967 = vmatpush1.msra.mxu0 0.0
    %968 = vmatprep.subr.mxu0 0.0
    %969 = vmatpush1.msra.mxu0 0.0
    %970 = vmatprep.subr.mxu0 0.0
    %971 = vmatpush1.msra.mxu0 0.0
    %972 = vmatprep.subr.mxu0 0.0
    %973 = vmatpush1.msra.mxu0 0.0
    %974 = vmatprep.subr.mxu0 0.0
    %975 = vmatpush1.msra.mxu0 0.0
    %976 = vmatprep.subr.mxu0 0.0
    %977 = vmatpush1.msra.mxu0 0.0
    %978 = vmatprep.subr.mxu0 0.0
    %979 = vmatpush1.msra.mxu0 0.0
    %980 = vmatprep.subr.mxu0 0.0
    %981 = vmatpush1.msra.mxu0 0.0
    %982 = vmatprep.subr.mxu0 0.0
    %983 = vmatpush1.msra.mxu0 0.0
    %984 = vmatprep.mubr.f32.mxu0 0.0
    %985 = vmatmul.mubr.f32.gmra.mrb[0].mxu0 %v918
    %v986 = vpop.f32.mrb[0].mxu0
    %v987 = vadd.f32 %v368, %v986
    %v988 = vpop.f32.mrb[0].mxu0
    %989 = vdwg.mxu0
    %991 = vrot.lane.b32.xlu0 %v987, 32
    %v992 = vpop.permute.xlu0 %991
    %vm994 = vcmask 388352
    %995 = vst.msk [vmem:[#allocation13] sm:$0xf] %vm994, %v992
    %s996 = scalar_lea.vmem %s1, 8
    %v997 = vld [vmem:[%s996] sm:$0xf]
    %998 = vmatprep.subr.mxu0 0.0
    %999 = vmatpush1.msra.mxu0 %v453
    %1000 = vmatprep.subr.mxu0 0.0
    %1001 = vmatpush1.msra.mxu0 %v454
    %1002 = vmatprep.subr.mxu0 0.0
    %1003 = vmatpush1.msra.mxu0 %v455
    %1004 = vmatprep.subr.mxu0 0.0
    %1005 = vmatpush1.msra.mxu0 %v456
    %1006 = vmatprep.subr.mxu0 0.0
    %1007 = vmatpush1.msra.mxu0 0.0
    %1008 = vmatprep.subr.mxu0 0.0
    %1009 = vmatpush1.msra.mxu0 0.0
    %1010 = vmatprep.subr.mxu0 0.0
    %1011 = vmatpush1.msra.mxu0 0.0
    %1012 = vmatprep.subr.mxu0 0.0
    %1013 = vmatpush1.msra.mxu0 0.0
    %1014 = vmatprep.subr.mxu0 0.0
    %1015 = vmatpush1.msra.mxu0 0.0
    %1016 = vmatprep.subr.mxu0 0.0
    %1017 = vmatpush1.msra.mxu0 0.0
    %1018 = vmatprep.subr.mxu0 0.0
    %1019 = vmatpush1.msra.mxu0 0.0
    %1020 = vmatprep.subr.mxu0 0.0
    %1021 = vmatpush1.msra.mxu0 0.0
    %1022 = vmatprep.subr.mxu0 0.0
    %1023 = vmatpush1.msra.mxu0 0.0
    %1024 = vmatprep.subr.mxu0 0.0
    %1025 = vmatpush1.msra.mxu0 0.0
    %1026 = vmatprep.subr.mxu0 0.0
    %1027 = vmatpush1.msra.mxu0 0.0
    %1028 = vmatprep.subr.mxu0 0.0
    %1029 = vmatpush1.msra.mxu0 0.0
    %1030 = vmatprep.subr.mxu0 0.0
    %1031 = vmatpush1.msra.mxu0 0.0
    %1032 = vmatprep.subr.mxu0 0.0
    %1033 = vmatpush1.msra.mxu0 0.0
    %1034 = vmatprep.subr.mxu0 0.0
    %1035 = vmatpush1.msra.mxu0 0.0
    %1036 = vmatprep.subr.mxu0 0.0
    %1037 = vmatpush1.msra.mxu0 0.0
    %1038 = vmatprep.subr.mxu0 0.0
    %1039 = vmatpush1.msra.mxu0 0.0
    %1040 = vmatprep.subr.mxu0 0.0
    %1041 = vmatpush1.msra.mxu0 0.0
    %1042 = vmatprep.subr.mxu0 0.0
    %1043 = vmatpush1.msra.mxu0 0.0
    %1044 = vmatprep.subr.mxu0 0.0
    %1045 = vmatpush1.msra.mxu0 0.0
    %1046 = vmatprep.subr.mxu0 0.0
    %1047 = vmatpush1.msra.mxu0 0.0
    %1048 = vmatprep.subr.mxu0 0.0
    %1049 = vmatpush1.msra.mxu0 0.0
    %1050 = vmatprep.subr.mxu0 0.0
    %1051 = vmatpush1.msra.mxu0 0.0
    %1052 = vmatprep.subr.mxu0 0.0
    %1053 = vmatpush1.msra.mxu0 0.0
    %1054 = vmatprep.subr.mxu0 0.0
    %1055 = vmatpush1.msra.mxu0 0.0
    %1056 = vmatprep.subr.mxu0 0.0
    %1057 = vmatpush1.msra.mxu0 0.0
    %1058 = vmatprep.subr.mxu0 0.0
    %1059 = vmatpush1.msra.mxu0 0.0
    %1060 = vmatprep.subr.mxu0 0.0
    %1061 = vmatpush1.msra.mxu0 0.0
    %1062 = vmatprep.mubr.f32.mxu0 0.0
    %1063 = vmatmul.mubr.f32.gmra.mrb[0].mxu0 %v918
    %v1064 = vpop.f32.mrb[0].mxu0
    %v1065 = vadd.f32 %v997, %v1064
    %v1066 = vpop.f32.mrb[0].mxu0
    %1067 = vdwg.mxu0
    %v1068 = vadd.f32 %v1065, %v206
    %v1069 = vmul.f32 %v1068, 0.5
    %v1070 = vtanh.pop %v1069
    %v1071 = vadd.f32 %v1070, 1.0
    %v1072 = vmul.f32 %v1071, 0.5
    %v1073 = vtanh.pop %v1068
    %v1074 = vmul.f32 %v1072, %v908
    %1076 = vrot.lane.b32.xlu0 %v1073, 32
    %v1077 = vpop.permute.xlu0 %1076
    %v1079 = vmul.f32 %v1072, %v1077
    %1081 = vrot.lane.b32.xlu0 %v1079, 32
    %v1082 = vpop.permute.xlu0 %1081
    %v1084 = vadd.f32 %v1074, %v1082
    %v1085 = vtanh.pop %v1084
    %1087 = vrot.lane.b32.xlu0 %v1085, 32
    %v1088 = vpop.permute.xlu0 %1087
    %v1090 = vmul.f32 %v1072, %v1088
    %1092 = vrot.lane.b32.xlu0 %v1090, 64
    %v1093 = vpop.permute.xlu0 %1092
    %v1094 = vsel %vm135, %v1093, 0
    %1096 = vmatprep.subr.mxu0 0.0
    %1097 = vmatpush1.msra.mxu0 %v465
    %1098 = vmatprep.subr.mxu0 0.0
    %1099 = vmatpush1.msra.mxu0 %v466
    %1100 = vmatprep.subr.mxu0 0.0
    %1101 = vmatpush1.msra.mxu0 %v467
    %1102 = vmatprep.subr.mxu0 0.0
    %1103 = vmatpush1.msra.mxu0 %v468
    %1104 = vmatprep.subr.mxu0 0.0
    %1105 = vmatpush1.msra.mxu0 0.0
    %1106 = vmatprep.subr.mxu0 0.0
    %1107 = vmatpush1.msra.mxu0 0.0
    %1108 = vmatprep.subr.mxu0 0.0
    %1109 = vmatpush1.msra.mxu0 0.0
    %1110 = vmatprep.subr.mxu0 0.0
    %1111 = vmatpush1.msra.mxu0 0.0
    %1112 = vmatprep.subr.mxu0 0.0
    %1113 = vmatpush1.msra.mxu0 0.0
    %1114 = vmatprep.subr.mxu0 0.0
    %1115 = vmatpush1.msra.mxu0 0.0
    %1116 = vmatprep.subr.mxu0 0.0
    %1117 = vmatpush1.msra.mxu0 0.0
    %1118 = vmatprep.subr.mxu0 0.0
    %1119 = vmatpush1.msra.mxu0 0.0
    %1120 = vmatprep.subr.mxu0 0.0
    %1121 = vmatpush1.msra.mxu0 0.0
    %1122 = vmatprep.subr.mxu0 0.0
    %1123 = vmatpush1.msra.mxu0 0.0
    %1124 = vmatprep.subr.mxu0 0.0
    %1125 = vmatpush1.msra.mxu0 0.0
    %1126 = vmatprep.subr.mxu0 0.0
    %1127 = vmatpush1.msra.mxu0 0.0
    %1128 = vmatprep.subr.mxu0 0.0
    %1129 = vmatpush1.msra.mxu0 0.0
    %1130 = vmatprep.subr.mxu0 0.0
    %1131 = vmatpush1.msra.mxu0 0.0
    %1132 = vmatprep.subr.mxu0 0.0
    %1133 = vmatpush1.msra.mxu0 0.0
    %1134 = vmatprep.subr.mxu0 0.0
    %1135 = vmatpush1.msra.mxu0 0.0
    %1136 = vmatprep.subr.mxu0 0.0
    %1137 = vmatpush1.msra.mxu0 0.0
    %1138 = vmatprep.subr.mxu0 0.0
    %1139 = vmatpush1.msra.mxu0 0.0
    %1140 = vmatprep.subr.mxu0 0.0
    %1141 = vmatpush1.msra.mxu0 0.0
    %1142 = vmatprep.subr.mxu0 0.0
    %1143 = vmatpush1.msra.mxu0 0.0
    %1144 = vmatprep.subr.mxu0 0.0
    %1145 = vmatpush1.msra.mxu0 0.0
    %1146 = vmatprep.subr.mxu0 0.0
    %1147 = vmatpush1.msra.mxu0 0.0
    %1148 = vmatprep.subr.mxu0 0.0
    %1149 = vmatpush1.msra.mxu0 0.0
    %1150 = vmatprep.subr.mxu0 0.0
    %1151 = vmatpush1.msra.mxu0 0.0
    %1152 = vmatprep.subr.mxu0 0.0
    %1153 = vmatpush1.msra.mxu0 0.0
    %1154 = vmatprep.subr.mxu0 0.0
    %1155 = vmatpush1.msra.mxu0 0.0
    %1156 = vmatprep.subr.mxu0 0.0
    %1157 = vmatpush1.msra.mxu0 0.0
    %1158 = vmatprep.subr.mxu0 0.0
    %1159 = vmatpush1.msra.mxu0 0.0
    %1160 = vmatprep.mubr.f32.mxu0 0.0
    %1161 = vmatmul.mubr.f32.gmra.mrb[0].mxu0 %v1094
    %v1162 = vpop.f32.mrb[0].mxu0
    %v1163 = vadd.f32 %v368, %v1162
    %v1164 = vpop.f32.mrb[0].mxu0
    %1165 = vdwg.mxu0
    %1167 = vrot.lane.b32.xlu0 %v1163, 48
    %v1168 = vpop.permute.xlu0 %1167
    %vm1170 = vcmask 519552
    %1171 = vst.msk [vmem:[#allocation13] sm:$0xf] %vm1170, %v1168
    %s1172 = scalar_lea.vmem %s1, 12
    %v1173 = vld [vmem:[%s1172] sm:$0xf]
    %1174 = vmatprep.subr.mxu0 0.0
    %1175 = vmatpush1.msra.mxu0 %v453
    %1176 = vmatprep.subr.mxu0 0.0
    %1177 = vmatpush1.msra.mxu0 %v454
    %1178 = vmatprep.subr.mxu0 0.0
    %1179 = vmatpush1.msra.mxu0 %v455
    %1180 = vmatprep.subr.mxu0 0.0
    %1181 = vmatpush1.msra.mxu0 %v456
    %1182 = vmatprep.subr.mxu0 0.0
    %1183 = vmatpush1.msra.mxu0 0.0
    %1184 = vmatprep.subr.mxu0 0.0
    %1185 = vmatpush1.msra.mxu0 0.0
    %1186 = vmatprep.subr.mxu0 0.0
    %1187 = vmatpush1.msra.mxu0 0.0
    %1188 = vmatprep.subr.mxu0 0.0
    %1189 = vmatpush1.msra.mxu0 0.0
    %1190 = vmatprep.subr.mxu0 0.0
    %1191 = vmatpush1.msra.mxu0 0.0
    %1192 = vmatprep.subr.mxu0 0.0
    %1193 = vmatpush1.msra.mxu0 0.0
    %1194 = vmatprep.subr.mxu0 0.0
    %1195 = vmatpush1.msra.mxu0 0.0
    %1196 = vmatprep.subr.mxu0 0.0
    %1197 = vmatpush1.msra.mxu0 0.0
    %1198 = vmatprep.subr.mxu0 0.0
    %1199 = vmatpush1.msra.mxu0 0.0
    %1200 = vmatprep.subr.mxu0 0.0
    %1201 = vmatpush1.msra.mxu0 0.0
    %1202 = vmatprep.subr.mxu0 0.0
    %1203 = vmatpush1.msra.mxu0 0.0
    %1204 = vmatprep.subr.mxu0 0.0
    %1205 = vmatpush1.msra.mxu0 0.0
    %1206 = vmatprep.subr.mxu0 0.0
    %1207 = vmatpush1.msra.mxu0 0.0
    %1208 = vmatprep.subr.mxu0 0.0
    %1209 = vmatpush1.msra.mxu0 0.0
    %1210 = vmatprep.subr.mxu0 0.0
    %1211 = vmatpush1.msra.mxu0 0.0
    %1212 = vmatprep.subr.mxu0 0.0
    %1213 = vmatpush1.msra.mxu0 0.0
    %1214 = vmatprep.subr.mxu0 0.0
    %1215 = vmatpush1.msra.mxu0 0.0
    %1216 = vmatprep.subr.mxu0 0.0
    %1217 = vmatpush1.msra.mxu0 0.0
    %1218 = vmatprep.subr.mxu0 0.0
    %1219 = vmatpush1.msra.mxu0 0.0
    %1220 = vmatprep.subr.mxu0 0.0
    %1221 = vmatpush1.msra.mxu0 0.0
    %1222 = vmatprep.subr.mxu0 0.0
    %1223 = vmatpush1.msra.mxu0 0.0
    %1224 = vmatprep.subr.mxu0 0.0
    %1225 = vmatpush1.msra.mxu0 0.0
    %1226 = vmatprep.subr.mxu0 0.0
    %1227 = vmatpush1.msra.mxu0 0.0
    %1228 = vmatprep.subr.mxu0 0.0
    %1229 = vmatpush1.msra.mxu0 0.0
    %1230 = vmatprep.subr.mxu0 0.0
    %1231 = vmatpush1.msra.mxu0 0.0
    %1232 = vmatprep.subr.mxu0 0.0
    %1233 = vmatpush1.msra.mxu0 0.0
    %1234 = vmatprep.subr.mxu0 0.0
    %1235 = vmatpush1.msra.mxu0 0.0
    %1236 = vmatprep.subr.mxu0 0.0
    %1237 = vmatpush1.msra.mxu0 0.0
    %1238 = vmatprep.mubr.f32.mxu0 0.0
    %1239 = vmatmul.mubr.f32.gmra.mrb[0].mxu0 %v1094
    %v1240 = vpop.f32.mrb[0].mxu0
    %v1241 = vadd.f32 %v1173, %v1240
    %v1242 = vpop.f32.mrb[0].mxu0
    %1243 = vdwg.mxu0
    %v1244 = vadd.f32 %v1241, %v206
    %v1245 = vmul.f32 %v1244, 0.5
    %v1246 = vtanh.pop %v1245
    %v1247 = vadd.f32 %v1246, 1.0
    %v1248 = vmul.f32 %v1247, 0.5
    %v1249 = vtanh.pop %v1244
    %v1250 = vmul.f32 %v1248, %v1084
    %1252 = vrot.lane.b32.xlu0 %v1249, 32
    %v1253 = vpop.permute.xlu0 %1252
    %v1255 = vmul.f32 %v1248, %v1253
    %1257 = vrot.lane.b32.xlu0 %v1255, 32
    %v1258 = vpop.permute.xlu0 %1257
    %v1260 = vadd.f32 %v1250, %v1258
    %v1261 = vtanh.pop %v1260
    %1263 = vrot.lane.b32.xlu0 %v1261, 32
    %v1264 = vpop.permute.xlu0 %1263
    %v1266 = vmul.f32 %v1248, %v1264
    %1268 = vrot.lane.b32.xlu0 %v1266, 64
    %v1269 = vpop.permute.xlu0 %1268
    %v1270 = vsel %vm135, %v1269, 0
    %1272 = vmatprep.subr.mxu0 0.0
    %1273 = vmatpush1.msra.mxu0 %v465
    %1274 = vmatprep.subr.mxu0 0.0
    %1275 = vmatpush1.msra.mxu0 %v466
    %1276 = vmatprep.subr.mxu0 0.0
    %1277 = vmatpush1.msra.mxu0 %v467
    %1278 = vmatprep.subr.mxu0 0.0
    %1279 = vmatpush1.msra.mxu0 %v468
    %1280 = vmatprep.subr.mxu0 0.0
    %1281 = vmatpush1.msra.mxu0 0.0
    %1282 = vmatprep.subr.mxu0 0.0
    %1283 = vmatpush1.msra.mxu0 0.0
    %1284 = vmatprep.subr.mxu0 0.0
    %1285 = vmatpush1.msra.mxu0 0.0
    %1286 = vmatprep.subr.mxu0 0.0
    %1287 = vmatpush1.msra.mxu0 0.0
    %1288 = vmatprep.subr.mxu0 0.0
    %1289 = vmatpush1.msra.mxu0 0.0
    %1290 = vmatprep.subr.mxu0 0.0
    %1291 = vmatpush1.msra.mxu0 0.0
    %1292 = vmatprep.subr.mxu0 0.0
    %1293 = vmatpush1.msra.mxu0 0.0
    %1294 = vmatprep.subr.mxu0 0.0
    %1295 = vmatpush1.msra.mxu0 0.0
    %1296 = vmatprep.subr.mxu0 0.0
    %1297 = vmatpush1.msra.mxu0 0.0
    %1298 = vmatprep.subr.mxu0 0.0
    %1299 = vmatpush1.msra.mxu0 0.0
    %1300 = vmatprep.subr.mxu0 0.0
    %1301 = vmatpush1.msra.mxu0 0.0
    %1302 = vmatprep.subr.mxu0 0.0
    %1303 = vmatpush1.msra.mxu0 0.0
    %1304 = vmatprep.subr.mxu0 0.0
    %1305 = vmatpush1.msra.mxu0 0.0
    %1306 = vmatprep.subr.mxu0 0.0
    %1307 = vmatpush1.msra.mxu0 0.0
    %1308 = vmatprep.subr.mxu0 0.0
    %1309 = vmatpush1.msra.mxu0 0.0
    %1310 = vmatprep.subr.mxu0 0.0
    %1311 = vmatpush1.msra.mxu0 0.0
    %1312 = vmatprep.subr.mxu0 0.0
    %1313 = vmatpush1.msra.mxu0 0.0
    %1314 = vmatprep.subr.mxu0 0.0
    %1315 = vmatpush1.msra.mxu0 0.0
    %1316 = vmatprep.subr.mxu0 0.0
    %1317 = vmatpush1.msra.mxu0 0.0
    %1318 = vmatprep.subr.mxu0 0.0
    %1319 = vmatpush1.msra.mxu0 0.0
    %1320 = vmatprep.subr.mxu0 0.0
    %1321 = vmatpush1.msra.mxu0 0.0
    %1322 = vmatprep.subr.mxu0 0.0
    %1323 = vmatpush1.msra.mxu0 0.0
    %1324 = vmatprep.subr.mxu0 0.0
    %1325 = vmatpush1.msra.mxu0 0.0
    %1326 = vmatprep.subr.mxu0 0.0
    %1327 = vmatpush1.msra.mxu0 0.0
    %1328 = vmatprep.subr.mxu0 0.0
    %1329 = vmatpush1.msra.mxu0 0.0
    %1330 = vmatprep.subr.mxu0 0.0
    %1331 = vmatpush1.msra.mxu0 0.0
    %1332 = vmatprep.subr.mxu0 0.0
    %1333 = vmatpush1.msra.mxu0 0.0
    %1334 = vmatprep.subr.mxu0 0.0
    %1335 = vmatpush1.msra.mxu0 0.0
    %1336 = vmatprep.mubr.f32.mxu0 0.0
    %1337 = vmatmul.mubr.f32.gmra.mrb[0].mxu0 %v1270
    %v1338 = vpop.f32.mrb[0].mxu0
    %v1339 = vadd.f32 %v368, %v1338
    %v1340 = vpop.f32.mrb[0].mxu0
    %1341 = vdwg.mxu0
    %1343 = vrot.lane.b32.xlu0 %v1339, 64
    %v1344 = vpop.permute.xlu0 %1343
    %vm1346 = vcmask 650752
    %1347 = vst.msk [vmem:[#allocation13] sm:$0xf] %vm1346, %v1344
    %1348 = vmatprep.subr.mxu0 %v458
    %1349 = vmatpush1.msra.mxu0 %v457
    %1350 = vmatprep.subr.mxu0 %v460
    %1351 = vmatpush1.msra.mxu0 %v459
    %1352 = vmatprep.subr.mxu0 %v462
    %1353 = vmatpush1.msra.mxu0 %v461
    %1354 = vmatprep.subr.mxu0 %v464
    %1355 = vmatpush1.msra.mxu0 %v463
    %1356 = vmatprep.subr.mxu0 0.0
    %1357 = vmatpush1.msra.mxu0 0.0
    %1358 = vmatprep.subr.mxu0 0.0
    %1359 = vmatpush1.msra.mxu0 0.0
    %1360 = vmatprep.subr.mxu0 0.0
    %1361 = vmatpush1.msra.mxu0 0.0
    %1362 = vmatprep.subr.mxu0 0.0
    %1363 = vmatpush1.msra.mxu0 0.0
    %1364 = vmatprep.subr.mxu0 0.0
    %1365 = vmatpush1.msra.mxu0 0.0
    %1366 = vmatprep.subr.mxu0 0.0
    %1367 = vmatpush1.msra.mxu0 0.0
    %1368 = vmatprep.subr.mxu0 0.0
    %1369 = vmatpush1.msra.mxu0 0.0
    %1370 = vmatprep.subr.mxu0 0.0
    %1371 = vmatpush1.msra.mxu0 0.0
    %1372 = vmatprep.subr.mxu0 0.0
    %1373 = vmatpush1.msra.mxu0 0.0
    %1374 = vmatprep.subr.mxu0 0.0
    %1375 = vmatpush1.msra.mxu0 0.0
    %1376 = vmatprep.subr.mxu0 0.0
    %1377 = vmatpush1.msra.mxu0 0.0
    %1378 = vmatprep.subr.mxu0 0.0
    %1379 = vmatpush1.msra.mxu0 0.0
    %1380 = vmatprep.subr.mxu0 0.0
    %1381 = vmatpush1.msra.mxu0 0.0
    %1382 = vmatprep.subr.mxu0 0.0
    %1383 = vmatpush1.msra.mxu0 0.0
    %1384 = vmatprep.subr.mxu0 0.0
    %1385 = vmatpush1.msra.mxu0 0.0
    %1386 = vmatprep.subr.mxu0 0.0
    %1387 = vmatpush1.msra.mxu0 0.0
    %1388 = vmatprep.subr.mxu0 0.0
    %1389 = vmatpush1.msra.mxu0 0.0
    %1390 = vmatprep.subr.mxu0 0.0
    %1391 = vmatpush1.msra.mxu0 0.0
    %1392 = vmatprep.subr.mxu0 0.0
    %1393 = vmatpush1.msra.mxu0 0.0
    %1394 = vmatprep.subr.mxu0 0.0
    %1395 = vmatpush1.msra.mxu0 0.0
    %1396 = vmatprep.subr.mxu0 0.0
    %1397 = vmatpush1.msra.mxu0 0.0
    %1398 = vmatprep.subr.mxu0 0.0
    %1399 = vmatpush1.msra.mxu0 0.0
    %1400 = vmatprep.subr.mxu0 0.0
    %1401 = vmatpush1.msra.mxu0 0.0
    %1402 = vmatprep.subr.mxu0 0.0
    %1403 = vmatpush1.msra.mxu0 0.0
    %1404 = vmatprep.subr.mxu0 0.0
    %1405 = vmatpush1.msra.mxu0 0.0
    %1406 = vmatprep.subr.mxu0 0.0
    %1407 = vmatpush1.msra.mxu0 0.0
    %1408 = vmatprep.subr.mxu0 0.0
    %1409 = vmatpush1.msra.mxu0 0.0
    %1410 = vmatprep.subr.mxu0 0.0
    %1411 = vmatpush1.msra.mxu0 0.0
    %1412 = vmatprep.mubr.f32.mxu0 0.0
    %1413 = vmatmul.mubr.f32.gmra.mrb[0].mxu0 %v1270
    %v1414 = vpop.f32.mrb[0].mxu0
    %v1415 = vadd.f32 0.0, %v1414
    %v1416 = vpop.f32.mrb[0].mxu0
    %v1417 = vadd.f32 0.0, %v1416
    %1418 = vdwg.mxu0
    %v1419 = vadd.f32 %v1415, %v1417
    %v1420 = vadd.f32 %v1419, %v287
    %v1421 = vmul.f32 %v1420, 0.5
    %v1422 = vtanh.pop %v1421
    %v1423 = vadd.f32 %v1422, 1.0
    %v1424 = vmul.f32 %v1423, 0.5
    %v1425 = vtanh.pop %v1420
    %v1426 = vmul.f32 %v1424, %v1260
    %1428 = vrot.lane.b32.xlu0 %v1425, 32
    %v1429 = vpop.permute.xlu0 %1428
    %v1431 = vmul.f32 %v1424, %v1429
    %1433 = vrot.lane.b32.xlu0 %v1431, 32
    %v1434 = vpop.permute.xlu0 %1433
    %v1436 = vadd.f32 %v1426, %v1434
    %v1437 = vtanh.pop %v1436
    %1439 = vrot.lane.b32.xlu0 %v1437, 32
    %v1440 = vpop.permute.xlu0 %1439
    %v1442 = vmul.f32 %v1424, %v1440
    %1444 = vrot.lane.b32.xlu0 %v1442, 64
    %v1445 = vpop.permute.xlu0 %1444
    %v1446 = vsel %vm135, %v1445, 0
    %1448 = vmatprep.subr.mxu0 0.0
    %1449 = vmatpush1.msra.mxu0 %v465
    %1450 = vmatprep.subr.mxu0 0.0
    %1451 = vmatpush1.msra.mxu0 %v466
    %1452 = vmatprep.subr.mxu0 0.0
    %1453 = vmatpush1.msra.mxu0 %v467
    %1454 = vmatprep.subr.mxu0 0.0
    %1455 = vmatpush1.msra.mxu0 %v468
    %1456 = vmatprep.subr.mxu0 0.0
    %1457 = vmatpush1.msra.mxu0 0.0
    %1458 = vmatprep.subr.mxu0 0.0
    %1459 = vmatpush1.msra.mxu0 0.0
    %1460 = vmatprep.subr.mxu0 0.0
    %1461 = vmatpush1.msra.mxu0 0.0
    %1462 = vmatprep.subr.mxu0 0.0
    %1463 = vmatpush1.msra.mxu0 0.0
    %1464 = vmatprep.subr.mxu0 0.0
    %1465 = vmatpush1.msra.mxu0 0.0
    %1466 = vmatprep.subr.mxu0 0.0
    %1467 = vmatpush1.msra.mxu0 0.0
    %1468 = vmatprep.subr.mxu0 0.0
    %1469 = vmatpush1.msra.mxu0 0.0
    %1470 = vmatprep.subr.mxu0 0.0
    %1471 = vmatpush1.msra.mxu0 0.0
    %1472 = vmatprep.subr.mxu0 0.0
    %1473 = vmatpush1.msra.mxu0 0.0
    %1474 = vmatprep.subr.mxu0 0.0
    %1475 = vmatpush1.msra.mxu0 0.0
    %1476 = vmatprep.subr.mxu0 0.0
    %1477 = vmatpush1.msra.mxu0 0.0
    %1478 = vmatprep.subr.mxu0 0.0
    %1479 = vmatpush1.msra.mxu0 0.0
    %1480 = vmatprep.subr.mxu0 0.0
    %1481 = vmatpush1.msra.mxu0 0.0
    %1482 = vmatprep.subr.mxu0 0.0
    %1483 = vmatpush1.msra.mxu0 0.0
    %1484 = vmatprep.subr.mxu0 0.0
    %1485 = vmatpush1.msra.mxu0 0.0
    %1486 = vmatprep.subr.mxu0 0.0
    %1487 = vmatpush1.msra.mxu0 0.0
    %1488 = vmatprep.subr.mxu0 0.0
    %1489 = vmatpush1.msra.mxu0 0.0
    %1490 = vmatprep.subr.mxu0 0.0
    %1491 = vmatpush1.msra.mxu0 0.0
    %1492 = vmatprep.subr.mxu0 0.0
    %1493 = vmatpush1.msra.mxu0 0.0
    %1494 = vmatprep.subr.mxu0 0.0
    %1495 = vmatpush1.msra.mxu0 0.0
    %1496 = vmatprep.subr.mxu0 0.0
    %1497 = vmatpush1.msra.mxu0 0.0
    %1498 = vmatprep.subr.mxu0 0.0
    %1499 = vmatpush1.msra.mxu0 0.0
    %1500 = vmatprep.subr.mxu0 0.0
    %1501 = vmatpush1.msra.mxu0 0.0
    %1502 = vmatprep.subr.mxu0 0.0
    %1503 = vmatpush1.msra.mxu0 0.0
    %1504 = vmatprep.subr.mxu0 0.0
    %1505 = vmatpush1.msra.mxu0 0.0
    %1506 = vmatprep.subr.mxu0 0.0
    %1507 = vmatpush1.msra.mxu0 0.0
    %1508 = vmatprep.subr.mxu0 0.0
    %1509 = vmatpush1.msra.mxu0 0.0
    %1510 = vmatprep.subr.mxu0 0.0
    %1511 = vmatpush1.msra.mxu0 0.0
    %1512 = vmatprep.mubr.f32.mxu0 0.0
    %1513 = vmatmul.mubr.f32.gmra.mrb[0].mxu0 %v1446
    %v1514 = vpop.f32.mrb[0].mxu0
    %v1515 = vadd.f32 %v368, %v1514
    %v1516 = vpop.f32.mrb[0].mxu0
    %1517 = vdwg.mxu0
    %1519 = vrot.lane.b32.xlu0 %v1515, 80
    %v1520 = vpop.permute.xlu0 %1519
    %vm1522 = vcmask 781952
    %1523 = vst.msk [vmem:[#allocation13] sm:$0xf] %vm1522, %v1520
    %s1524 = scalar_lea.vmem %s1, 20
    %v1525 = vld [vmem:[%s1524] sm:$0xf]
    %1526 = vmatprep.subr.mxu0 0.0
    %1527 = vmatpush1.msra.mxu0 %v453
    %1528 = vmatprep.subr.mxu0 0.0
    %1529 = vmatpush1.msra.mxu0 %v454
    %1530 = vmatprep.subr.mxu0 0.0
    %1531 = vmatpush1.msra.mxu0 %v455
    %1532 = vmatprep.subr.mxu0 0.0
    %1533 = vmatpush1.msra.mxu0 %v456
    %1534 = vmatprep.subr.mxu0 0.0
    %1535 = vmatpush1.msra.mxu0 0.0
    %1536 = vmatprep.subr.mxu0 0.0
    %1537 = vmatpush1.msra.mxu0 0.0
    %1538 = vmatprep.subr.mxu0 0.0
    %1539 = vmatpush1.msra.mxu0 0.0
    %1540 = vmatprep.subr.mxu0 0.0
    %1541 = vmatpush1.msra.mxu0 0.0
    %1542 = vmatprep.subr.mxu0 0.0
    %1543 = vmatpush1.msra.mxu0 0.0
    %1544 = vmatprep.subr.mxu0 0.0
    %1545 = vmatpush1.msra.mxu0 0.0
    %1546 = vmatprep.subr.mxu0 0.0
    %1547 = vmatpush1.msra.mxu0 0.0
    %1548 = vmatprep.subr.mxu0 0.0
    %1549 = vmatpush1.msra.mxu0 0.0
    %1550 = vmatprep.subr.mxu0 0.0
    %1551 = vmatpush1.msra.mxu0 0.0
    %1552 = vmatprep.subr.mxu0 0.0
    %1553 = vmatpush1.msra.mxu0 0.0
    %1554 = vmatprep.subr.mxu0 0.0
    %1555 = vmatpush1.msra.mxu0 0.0
    %1556 = vmatprep.subr.mxu0 0.0
    %1557 = vmatpush1.msra.mxu0 0.0
    %1558 = vmatprep.subr.mxu0 0.0
    %1559 = vmatpush1.msra.mxu0 0.0
    %1560 = vmatprep.subr.mxu0 0.0
    %1561 = vmatpush1.msra.mxu0 0.0
    %1562 = vmatprep.subr.mxu0 0.0
    %1563 = vmatpush1.msra.mxu0 0.0
    %1564 = vmatprep.subr.mxu0 0.0
    %1565 = vmatpush1.msra.mxu0 0.0
    %1566 = vmatprep.subr.mxu0 0.0
    %1567 = vmatpush1.msra.mxu0 0.0
    %1568 = vmatprep.subr.mxu0 0.0
    %1569 = vmatpush1.msra.mxu0 0.0
    %1570 = vmatprep.subr.mxu0 0.0
    %1571 = vmatpush1.msra.mxu0 0.0
    %1572 = vmatprep.subr.mxu0 0.0
    %1573 = vmatpush1.msra.mxu0 0.0
    %1574 = vmatprep.subr.mxu0 0.0
    %1575 = vmatpush1.msra.mxu0 0.0
    %1576 = vmatprep.subr.mxu0 0.0
    %1577 = vmatpush1.msra.mxu0 0.0
    %1578 = vmatprep.subr.mxu0 0.0
    %1579 = vmatpush1.msra.mxu0 0.0
    %1580 = vmatprep.subr.mxu0 0.0
    %1581 = vmatpush1.msra.mxu0 0.0
    %1582 = vmatprep.subr.mxu0 0.0
    %1583 = vmatpush1.msra.mxu0 0.0
    %1584 = vmatprep.subr.mxu0 0.0
    %1585 = vmatpush1.msra.mxu0 0.0
    %1586 = vmatprep.subr.mxu0 0.0
    %1587 = vmatpush1.msra.mxu0 0.0
    %1588 = vmatprep.subr.mxu0 0.0
    %1589 = vmatpush1.msra.mxu0 0.0
    %1590 = vmatprep.mubr.f32.mxu0 0.0
    %1591 = vmatmul.mubr.f32.gmra.mrb[0].mxu0 %v1446
    %v1592 = vpop.f32.mrb[0].mxu0
    %v1593 = vadd.f32 %v1525, %v1592
    %v1594 = vpop.f32.mrb[0].mxu0
    %1595 = vdwg.mxu0
    %v1596 = vadd.f32 %v1593, %v206
    %v1597 = vmul.f32 %v1596, 0.5
    %v1598 = vtanh.pop %v1597
    %v1599 = vadd.f32 %v1598, 1.0
    %v1600 = vmul.f32 %v1599, 0.5
    %v1601 = vtanh.pop %v1596
    %v1602 = vmul.f32 %v1600, %v1436
    %1604 = vrot.lane.b32.xlu0 %v1601, 32
    %v1605 = vpop.permute.xlu0 %1604
    %v1607 = vmul.f32 %v1600, %v1605
    %1609 = vrot.lane.b32.xlu0 %v1607, 32
    %v1610 = vpop.permute.xlu0 %1609
    %v1612 = vadd.f32 %v1602, %v1610
    %v1613 = vtanh.pop %v1612
    %1615 = vrot.lane.b32.xlu0 %v1613, 32
    %v1616 = vpop.permute.xlu0 %1615
    %v1618 = vmul.f32 %v1600, %v1616
    %1620 = vrot.lane.b32.xlu0 %v1618, 64
    %v1621 = vpop.permute.xlu0 %1620
    %v1622 = vsel %vm135, %v1621, 0
    %1624 = vmatprep.subr.mxu0 0.0
    %1625 = vmatpush1.msra.mxu0 %v465
    %1626 = vmatprep.subr.mxu0 0.0
    %1627 = vmatpush1.msra.mxu0 %v466
    %1628 = vmatprep.subr.mxu0 0.0
    %1629 = vmatpush1.msra.mxu0 %v467
    %1630 = vmatprep.subr.mxu0 0.0
    %1631 = vmatpush1.msra.mxu0 %v468
    %1632 = vmatprep.subr.mxu0 0.0
    %1633 = vmatpush1.msra.mxu0 0.0
    %1634 = vmatprep.subr.mxu0 0.0
    %1635 = vmatpush1.msra.mxu0 0.0
    %1636 = vmatprep.subr.mxu0 0.0
    %1637 = vmatpush1.msra.mxu0 0.0
    %1638 = vmatprep.subr.mxu0 0.0
    %1639 = vmatpush1.msra.mxu0 0.0
    %1640 = vmatprep.subr.mxu0 0.0
    %1641 = vmatpush1.msra.mxu0 0.0
    %1642 = vmatprep.subr.mxu0 0.0
    %1643 = vmatpush1.msra.mxu0 0.0
    %1644 = vmatprep.subr.mxu0 0.0
    %1645 = vmatpush1.msra.mxu0 0.0
    %1646 = vmatprep.subr.mxu0 0.0
    %1647 = vmatpush1.msra.mxu0 0.0
    %1648 = vmatprep.subr.mxu0 0.0
    %1649 = vmatpush1.msra.mxu0 0.0
    %1650 = vmatprep.subr.mxu0 0.0
    %1651 = vmatpush1.msra.mxu0 0.0
    %1652 = vmatprep.subr.mxu0 0.0
    %1653 = vmatpush1.msra.mxu0 0.0
    %1654 = vmatprep.subr.mxu0 0.0
    %1655 = vmatpush1.msra.mxu0 0.0
    %1656 = vmatprep.subr.mxu0 0.0
    %1657 = vmatpush1.msra.mxu0 0.0
    %1658 = vmatprep.subr.mxu0 0.0
    %1659 = vmatpush1.msra.mxu0 0.0
    %1660 = vmatprep.subr.mxu0 0.0
    %1661 = vmatpush1.msra.mxu0 0.0
    %1662 = vmatprep.subr.mxu0 0.0
    %1663 = vmatpush1.msra.mxu0 0.0
    %1664 = vmatprep.subr.mxu0 0.0
    %1665 = vmatpush1.msra.mxu0 0.0
    %1666 = vmatprep.subr.mxu0 0.0
    %1667 = vmatpush1.msra.mxu0 0.0
    %1668 = vmatprep.subr.mxu0 0.0
    %1669 = vmatpush1.msra.mxu0 0.0
    %1670 = vmatprep.subr.mxu0 0.0
    %1671 = vmatpush1.msra.mxu0 0.0
    %1672 = vmatprep.subr.mxu0 0.0
    %1673 = vmatpush1.msra.mxu0 0.0
    %1674 = vmatprep.subr.mxu0 0.0
    %1675 = vmatpush1.msra.mxu0 0.0
    %1676 = vmatprep.subr.mxu0 0.0
    %1677 = vmatpush1.msra.mxu0 0.0
    %1678 = vmatprep.subr.mxu0 0.0
    %1679 = vmatpush1.msra.mxu0 0.0
    %1680 = vmatprep.subr.mxu0 0.0
    %1681 = vmatpush1.msra.mxu0 0.0
    %1682 = vmatprep.subr.mxu0 0.0
    %1683 = vmatpush1.msra.mxu0 0.0
    %1684 = vmatprep.subr.mxu0 0.0
    %1685 = vmatpush1.msra.mxu0 0.0
    %1686 = vmatprep.subr.mxu0 0.0
    %1687 = vmatpush1.msra.mxu0 0.0
    %1688 = vmatprep.mubr.f32.mxu0 0.0
    %1689 = vmatmul.mubr.f32.gmra.mrb[0].mxu0 %v1622
    %v1690 = vpop.f32.mrb[0].mxu0
    %v1691 = vadd.f32 %v368, %v1690
    %v1692 = vpop.f32.mrb[0].mxu0
    %1693 = vdwg.mxu0
    %1695 = vrot.lane.b32.xlu0 %v1691, 96
    %v1696 = vpop.permute.xlu0 %1695
    %vm1698 = vcmask 913152
    %1699 = vst.msk [vmem:[#allocation13] sm:$0xf] %vm1698, %v1696
    %1700 = vmatprep.subr.mxu0 %v458
    %1701 = vmatpush1.msra.mxu0 %v457
    %1702 = vmatprep.subr.mxu0 %v460
    %1703 = vmatpush1.msra.mxu0 %v459
    %1704 = vmatprep.subr.mxu0 %v462
    %1705 = vmatpush1.msra.mxu0 %v461
    %1706 = vmatprep.subr.mxu0 %v464
    %1707 = vmatpush1.msra.mxu0 %v463
    %1708 = vmatprep.subr.mxu0 0.0
    %1709 = vmatpush1.msra.mxu0 0.0
    %1710 = vmatprep.subr.mxu0 0.0
    %1711 = vmatpush1.msra.mxu0 0.0
    %1712 = vmatprep.subr.mxu0 0.0
    %1713 = vmatpush1.msra.mxu0 0.0
    %1714 = vmatprep.subr.mxu0 0.0
    %1715 = vmatpush1.msra.mxu0 0.0
    %1716 = vmatprep.subr.mxu0 0.0
    %1717 = vmatpush1.msra.mxu0 0.0
    %1718 = vmatprep.subr.mxu0 0.0
    %1719 = vmatpush1.msra.mxu0 0.0
    %1720 = vmatprep.subr.mxu0 0.0
    %1721 = vmatpush1.msra.mxu0 0.0
    %1722 = vmatprep.subr.mxu0 0.0
    %1723 = vmatpush1.msra.mxu0 0.0
    %1724 = vmatprep.subr.mxu0 0.0
    %1725 = vmatpush1.msra.mxu0 0.0
    %1726 = vmatprep.subr.mxu0 0.0
    %1727 = vmatpush1.msra.mxu0 0.0
    %1728 = vmatprep.subr.mxu0 0.0
    %1729 = vmatpush1.msra.mxu0 0.0
    %1730 = vmatprep.subr.mxu0 0.0
    %1731 = vmatpush1.msra.mxu0 0.0
    %1732 = vmatprep.subr.mxu0 0.0
    %1733 = vmatpush1.msra.mxu0 0.0
    %1734 = vmatprep.subr.mxu0 0.0
    %1735 = vmatpush1.msra.mxu0 0.0
    %1736 = vmatprep.subr.mxu0 0.0
    %1737 = vmatpush1.msra.mxu0 0.0
    %1738 = vmatprep.subr.mxu0 0.0
    %1739 = vmatpush1.msra.mxu0 0.0
    %1740 = vmatprep.subr.mxu0 0.0
    %1741 = vmatpush1.msra.mxu0 0.0
    %1742 = vmatprep.subr.mxu0 0.0
    %1743 = vmatpush1.msra.mxu0 0.0
    %1744 = vmatprep.subr.mxu0 0.0
    %1745 = vmatpush1.msra.mxu0 0.0
    %1746 = vmatprep.subr.mxu0 0.0
    %1747 = vmatpush1.msra.mxu0 0.0
    %1748 = vmatprep.subr.mxu0 0.0
    %1749 = vmatpush1.msra.mxu0 0.0
    %1750 = vmatprep.subr.mxu0 0.0
    %1751 = vmatpush1.msra.mxu0 0.0
    %1752 = vmatprep.subr.mxu0 0.0
    %1753 = vmatpush1.msra.mxu0 0.0
    %1754 = vmatprep.subr.mxu0 0.0
    %1755 = vmatpush1.msra.mxu0 0.0
    %1756 = vmatprep.subr.mxu0 0.0
    %1757 = vmatpush1.msra.mxu0 0.0
    %1758 = vmatprep.subr.mxu0 0.0
    %1759 = vmatpush1.msra.mxu0 0.0
    %1760 = vmatprep.subr.mxu0 0.0
    %1761 = vmatpush1.msra.mxu0 0.0
    %1762 = vmatprep.subr.mxu0 0.0
    %1763 = vmatpush1.msra.mxu0 0.0
    %1764 = vmatprep.mubr.f32.mxu0 0.0
    %1765 = vmatmul.mubr.f32.gmra.mrb[0].mxu0 %v1622
    %v1766 = vpop.f32.mrb[0].mxu0
    %v1767 = vadd.f32 0.0, %v1766
    %v1768 = vpop.f32.mrb[0].mxu0
    %v1769 = vadd.f32 0.0, %v1768
    %1770 = vdwg.mxu0
    %v1771 = vadd.f32 %v1767, %v1769
    %v1772 = vadd.f32 %v1771, %v287
    %v1773 = vmul.f32 %v1772, 0.5
    %v1774 = vtanh.pop %v1773
    %v1775 = vadd.f32 %v1774, 1.0
    %v1776 = vmul.f32 %v1775, 0.5
    %v1777 = vtanh.pop %v1772
    %v1778 = vmul.f32 %v1776, %v1612
    %1780 = vrot.lane.b32.xlu0 %v1777, 32
    %v1781 = vpop.permute.xlu0 %1780
    %v1783 = vmul.f32 %v1776, %v1781
    %1785 = vrot.lane.b32.xlu0 %v1783, 32
    %v1786 = vpop.permute.xlu0 %1785
    %v1788 = vadd.f32 %v1778, %v1786
    %v1789 = vtanh.pop %v1788
    %1791 = vrot.lane.b32.xlu0 %v1789, 32
    %v1792 = vpop.permute.xlu0 %1791
    %v1794 = vmul.f32 %v1776, %v1792
    %1796 = vrot.lane.b32.xlu0 %v1794, 64
    %v1797 = vpop.permute.xlu0 %1796
    %v1798 = vsel %vm135, %v1797, 0
    %1800 = vmatprep.subr.mxu0 0.0
    %1801 = vmatpush1.msra.mxu0 %v465
    %1802 = vmatprep.subr.mxu0 0.0
    %1803 = vmatpush1.msra.mxu0 %v466
    %1804 = vmatprep.subr.mxu0 0.0
    %1805 = vmatpush1.msra.mxu0 %v467
    %1806 = vmatprep.subr.mxu0 0.0
    %1807 = vmatpush1.msra.mxu0 %v468
    %1808 = vmatprep.subr.mxu0 0.0
    %1809 = vmatpush1.msra.mxu0 0.0
    %1810 = vmatprep.subr.mxu0 0.0
    %1811 = vmatpush1.msra.mxu0 0.0
    %1812 = vmatprep.subr.mxu0 0.0
    %1813 = vmatpush1.msra.mxu0 0.0
    %1814 = vmatprep.subr.mxu0 0.0
    %1815 = vmatpush1.msra.mxu0 0.0
    %1816 = vmatprep.subr.mxu0 0.0
    %1817 = vmatpush1.msra.mxu0 0.0
    %1818 = vmatprep.subr.mxu0 0.0
    %1819 = vmatpush1.msra.mxu0 0.0
    %1820 = vmatprep.subr.mxu0 0.0
    %1821 = vmatpush1.msra.mxu0 0.0
    %1822 = vmatprep.subr.mxu0 0.0
    %1823 = vmatpush1.msra.mxu0 0.0
    %1824 = vmatprep.subr.mxu0 0.0
    %1825 = vmatpush1.msra.mxu0 0.0
    %1826 = vmatprep.subr.mxu0 0.0
    %1827 = vmatpush1.msra.mxu0 0.0
    %1828 = vmatprep.subr.mxu0 0.0
    %1829 = vmatpush1.msra.mxu0 0.0
    %1830 = vmatprep.subr.mxu0 0.0
    %1831 = vmatpush1.msra.mxu0 0.0
    %1832 = vmatprep.subr.mxu0 0.0
    %1833 = vmatpush1.msra.mxu0 0.0
    %1834 = vmatprep.subr.mxu0 0.0
    %1835 = vmatpush1.msra.mxu0 0.0
    %1836 = vmatprep.subr.mxu0 0.0
    %1837 = vmatpush1.msra.mxu0 0.0
    %1838 = vmatprep.subr.mxu0 0.0
    %1839 = vmatpush1.msra.mxu0 0.0
    %1840 = vmatprep.subr.mxu0 0.0
    %1841 = vmatpush1.msra.mxu0 0.0
    %1842 = vmatprep.subr.mxu0 0.0
    %1843 = vmatpush1.msra.mxu0 0.0
    %1844 = vmatprep.subr.mxu0 0.0
    %1845 = vmatpush1.msra.mxu0 0.0
    %1846 = vmatprep.subr.mxu0 0.0
    %1847 = vmatpush1.msra.mxu0 0.0
    %1848 = vmatprep.subr.mxu0 0.0
    %1849 = vmatpush1.msra.mxu0 0.0
    %1850 = vmatprep.subr.mxu0 0.0
    %1851 = vmatpush1.msra.mxu0 0.0
    %1852 = vmatprep.subr.mxu0 0.0
    %1853 = vmatpush1.msra.mxu0 0.0
    %1854 = vmatprep.subr.mxu0 0.0
    %1855 = vmatpush1.msra.mxu0 0.0
    %1856 = vmatprep.subr.mxu0 0.0
    %1857 = vmatpush1.msra.mxu0 0.0
    %1858 = vmatprep.subr.mxu0 0.0
    %1859 = vmatpush1.msra.mxu0 0.0
    %1860 = vmatprep.subr.mxu0 0.0
    %1861 = vmatpush1.msra.mxu0 0.0
    %1862 = vmatprep.subr.mxu0 0.0
    %1863 = vmatpush1.msra.mxu0 0.0
    %1864 = vmatprep.mubr.f32.mxu0 0.0
    %1865 = vmatmul.mubr.f32.gmra.mrb[0].mxu0 %v1798
    %v1866 = vpop.f32.mrb[0].mxu0
    %v1867 = vadd.f32 %v368, %v1866
    %v1868 = vpop.f32.mrb[0].mxu0
    %1869 = vdwg.mxu0
    %1871 = vrot.lane.b32.xlu0 %v1867, 112
    %v1872 = vpop.permute.xlu0 %1871
    %vm1874 = vcmask 1044352
    %1875 = vst.msk [vmem:[#allocation13] sm:$0xf] %vm1874, %v1872
    // Predicated region
    $region78: #{tpu_custom_call.1} parent=1 // pred_check
      _
    $region79: #{tpu_custom_call.1} parent=1 // pred_check_branch
      %1877 = sbr.rel (0) target = $region81
    $region80: #{tpu_custom_call.1} parent=1 // pred_region
      %s1879 = ssub.s32 64, 64
      %1880 = vsyncadd [#allocation4], %s1879
      %s1882 = sshll.u32 [#allocation13], 4
      %s1883 = int_to_ptr.vmem [resolvable:$true] %s1882
      %1885 = dma.vmem_to_hbm [thread:$0]  %s1883, 64, %s13, [#allocation4]
    $region81: #{tpu_custom_call.1} parent=1 // pred_fallthru
      _
    // Predicated region
    $region82: #{tpu_custom_call.1} parent=1 // pred_check
      _
    $region83: #{tpu_custom_call.1} parent=1 // pred_check_branch
      %1887 = sbr.rel (0) target = $region85
    $region84: #{tpu_custom_call.1} parent=1 // pred_region
      %1888 = dma.done [#allocation4], 64
    $region85: #{tpu_custom_call.1} parent=1 // pred_fallthru
      _
    %1889 = vsyncpa [#allocation3], 1
    %1890 = vsyncpa [#allocation6], 1
    %1891 = vsyncpa [#allocation9], 1
    %1892 = vsyncpa [#allocation12], 1
    %1893 = vsyncpa [#allocation4], 1

</llo_original>
